<compile_context>
chip_gen: v6e
topology: v6e:2x2x1
jax: 0.10.0
libtpu: 0.0.40
codegen_flags: <defaults>
</compile_context>

<pallas_src>
import functools

import jax
import jax.numpy as jnp
from jax.experimental import pallas as pl
from jax.experimental.pallas import tpu as pltpu


def _cdiv(a, b):
    return -(-a // b)


# ---------------------------------------------------------------------------
# Kernels: stride-1 VALID conv + folded-BN bias + SiLU.
# Grid = (N, n_h, n_c2).
#   x_ref : (1, 1, C1, TH + K - 1, W_sub)   halo row-band for this (n, h)
#   w_ref : (TC2, K*K*C1)                   BN-folded weight, im2col layout
#   b_ref : (TC2, 1)                        folded BN bias (f32)
#   o_ref : (1, TC2, TH*W_out)              flattened-NCHW output tile (lane dense)
# ---------------------------------------------------------------------------
def _conv_im2col_kernel(x_ref, w_ref, b_ref, o_ref, xt_ref, *, K, TH, W_out, C1):
    """Small-C1 path: build the im2col patch matrix once per (n, h) with ONE
    rectangular store per tap, reduce the whole K*K*C1 contraction with a
    single MXU matmul."""
    # The scratch depends only on (n, h); rebuild it only on the first c2 step
    # (the c2 grid axis is "arbitrary", i.e. sequential within a core).
    @pl.when(pl.program_id(2) == 0)
    def _():
        for kh in range(K):
            band = x_ref[0, 0, :, kh:kh + TH, :]            # (C1, TH, W_sub) one load per kh
            for kw in range(K):
                j = kh * K + kw
                slab = band[:, :, kw:kw + W_out]            # (C1, TH, W_out)
                xt_ref[j * C1:(j + 1) * C1, :] = slab.reshape(C1, TH * W_out)

    acc = jnp.dot(w_ref[...], xt_ref[...], preferred_element_type=jnp.float32)
    y = acc + b_ref[...]
    y = y * jax.nn.sigmoid(y)                                # SiLU
    o_ref[0] = y.astype(o_ref.dtype)


def _conv_direct_kernel(x_ref, w_ref, b_ref, o_ref, *, K, TH, W_out, C1):
    """Large-C1 path: skip the im2col scratch (no K^2 rewrite of the input
    through VMEM); accumulate K*K per-tap MXU matmuls in f32 — the C1
    contraction already fills the MXU depth."""
    acc = jnp.zeros((o_ref.shape[1], TH * W_out), jnp.float32)
    for kh in range(K):
        band = x_ref[0, 0, :, kh:kh + TH, :]                # (C1, TH, W_sub)
        for kw in range(K):
            j = kh * K + kw
            patch = band[:, :, kw:kw + W_out].reshape(C1, TH * W_out)
            acc = acc + jnp.dot(w_ref[:, j * C1:(j + 1) * C1], patch,
                                preferred_element_type=jnp.float32)
    y = acc + b_ref[...]
    y = y * jax.nn.sigmoid(y)
    o_ref[0] = y.astype(o_ref.dtype)


# ---------------------------------------------------------------------------
# Tile selection
# ---------------------------------------------------------------------------
def _pick_tile_c2(c2):
    """Output-channel block aligned to the MXU M dimension."""
    if c2 > 256 and c2 % 256 == 0:
        return 256
    if c2 > 128 and c2 % 128 == 0:
        return 128
    return c2


def _pick_tile_h(h_out, w_out, c1, k, w_sub, tc2, kkc, itemsize, budget=20 << 20):
    """Pick the output-row tile TH: lane-dense output blocks (TH*W_out % 128),
    prefer >= 2 h-steps (pipelining / megacore), largest tile within budget."""
    def footprint(th):
        band = 2 * c1 * (th + k - 1) * w_sub * itemsize      # dbl-buffered input band
        wblk = 2 * tc2 * kkc * itemsize                       # dbl-buffered weight block
        outb = 2 * tc2 * th * w_out * itemsize                # dbl-buffered output block
        scr = kkc * th * w_out * itemsize                     # im2col scratch (worst case)
        epi = tc2 * th * w_out * 4                            # f32 epilogue temps
        return band + wblk + outb + scr + epi

    aligned = [th for th in range(1, h_out + 1)
               if (th * w_out) % 128 == 0 and footprint(th) <= budget]
    if aligned:
        multi = [th for th in aligned if _cdiv(h_out, th) >= 2]
        return max(multi) if multi else max(aligned)
    # TODO(synk): no lane-aligned tile available (e.g. H_out=W_out=20) — fall
    # back to one full-H tile (block == full dim, masked stores).
    return h_out


# ---------------------------------------------------------------------------
# Stride-1 VALID conv on an already-padded NCHW image + folded BN + SiLU
# ---------------------------------------------------------------------------
def _conv_bn_silu_valid_s1(x_eff, w_eff, bias, out_dtype):
    """x_eff: (N, C1, H_out+K-1, W_out+K-1); w_eff: (C2, C1, K, K) f32 with BN
    scale folded in; bias: (C2,) f32.  Returns (N, C2, H_out, W_out)."""
    N, C1, H_sub, W_sub = x_eff.shape
    C2, _, K, _ = w_eff.shape
    H_out = H_sub - K + 1
    W_out = W_sub - K + 1

    # Pad input channels to a multiple of 8 -> aligned sublane slices.
    C1p = _cdiv(C1, 8) * 8
    if C1p != C1:
        x_eff = jnp.pad(x_eff, ((0, 0), (0, C1p - C1), (0, 0), (0, 0)))
        w_eff = jnp.pad(w_eff, ((0, 0), (0, C1p - C1), (0, 0), (0, 0)))

    KKC = K * K * C1p
    TC2 = _pick_tile_c2(C2)
    n_c2 = C2 // TC2
    itemsize = x_eff.dtype.itemsize
    TH = _pick_tile_h(H_out, W_out, C1p, K, W_sub, TC2, KKC, itemsize)
    n_h = _cdiv(H_out, TH)
    H_pad = n_h * TH
    if H_pad > H_out:                      # pad rows so the last H tile is full
        x_eff = jnp.pad(x_eff, ((0, 0), (0, 0), (0, H_pad - H_out), (0, 0)))
    TH_in = TH + K - 1

    # Halo row-bands: VMEM scales with TH instead of the whole feature map.
    if n_h == 1:
        x_b = x_eff[:, None]
    else:
        x_b = jnp.concatenate(
            [x_eff[:, None, :, h * TH:h * TH + TH_in, :] for h in range(n_h)],
            axis=1)                                          # (N, n_h, C1p, TH_in, W_sub)

    # Weight in im2col layout: column index = (kh*K + kw)*C1p + c.
    w2 = jnp.transpose(w_eff, (0, 2, 3, 1)).reshape(C2, KKC).astype(x_eff.dtype)
    b2 = bias.reshape(C2, 1).astype(jnp.float32)

    use_direct = C1p >= 128
    if use_direct:
        kernel = functools.partial(_conv_direct_kernel, K=K, TH=TH, W_out=W_out, C1=C1p)
        scratch = []
    else:
        kernel = functools.partial(_conv_im2col_kernel, K=K, TH=TH, W_out=W_out, C1=C1p)
        scratch = [pltpu.VMEM((KKC, TH * W_out), x_eff.dtype)]

    out = pl.pallas_call(
        kernel,
        out_shape=jax.ShapeDtypeStruct((N, C2, H_pad * W_out), out_dtype),
        grid=(N, n_h, n_c2),
        in_specs=[
            pl.BlockSpec((1, 1, C1p, TH_in, W_sub), lambda n, h, c: (n, h, 0, 0, 0)),
            pl.BlockSpec((TC2, KKC), lambda n, h, c: (c, 0)),
            pl.BlockSpec((TC2, 1), lambda n, h, c: (c, 0)),
        ],
        out_specs=pl.BlockSpec((1, TC2, TH * W_out), lambda n, h, c: (n, c, h)),
        scratch_shapes=scratch,
        compiler_params=pltpu.CompilerParams(
            dimension_semantics=("parallel", "parallel", "arbitrary"),
            vmem_limit_bytes=32 * 1024 * 1024),
    )(x_b, w2, b2)

    out = out.reshape(N, C2, H_pad, W_out)
    if H_pad > H_out:
        out = out[:, :, :H_out, :]
    return out


# ---------------------------------------------------------------------------
# Public entry point: SiLU(BN_eval(Conv2d(x)))   (NCHW in / NCHW out)
# ---------------------------------------------------------------------------
def conv_bn_silu(x, weight, gamma, beta, running_mean, running_var,
                 *, stride=1, padding=None, eps=1e-5):
    N, C1, H, W = x.shape
    C2, C1w, K, Kw = weight.shape
    assert C1 == C1w and K == Kw
    s = int(stride)
    p = (K // 2) if padding is None else padding             # autopad(k, p, d=1)
    H_out = (H + 2 * p - K) // s + 1
    W_out = (W + 2 * p - K) // s + 1

    # Eval-mode BatchNorm folded into a per-output-channel scale + bias.
    scale = (gamma / jnp.sqrt(running_var + eps)).astype(jnp.float32)
    bias = (beta - running_mean * scale).astype(jnp.float32)
    w_f = weight.astype(jnp.float32) * scale[:, None, None, None]

    if s == 1:
        x_eff = jnp.pad(x, ((0, 0), (0, 0), (p, p), (p, p)))
        w_eff = w_f
    else:
        # Space-to-depth: stride-s KxK conv on the padded image is exactly a
        # stride-1 Kq x Kq VALID conv (Kq = ceil(K/s)) on the s*s-phase
        # subsampled image with s*s*C1 channels (zero taps for invalid phases).
        Kq = _cdiv(K, s)
        H_sub = H_out + Kq - 1
        W_sub = W_out + Kq - 1
        x_p = jnp.pad(x, ((0, 0), (0, 0),
                          (p, H_sub * s - H - p), (p, W_sub * s - W - p)))
        x_eff = x_p.reshape(N, C1, H_sub, s, W_sub, s)
        x_eff = jnp.transpose(x_eff, (0, 3, 5, 1, 2, 4))
        x_eff = x_eff.reshape(N, s * s * C1, H_sub, W_sub)
        w_eff = jnp.zeros((C2, s * s * C1, Kq, Kq), jnp.float32)
        for rh in range(s):
            for rw in range(s):
                sub = w_f[:, :, rh::s, rw::s]                 # (C2, C1, nqh, nqw)
                ph = rh * s + rw
                w_eff = w_eff.at[:, ph * C1:(ph + 1) * C1,
                                 :sub.shape[2], :sub.shape[3]].set(sub)

    return _conv_bn_silu_valid_s1(x_eff, w_eff, bias, x.dtype)


# ---------------------------------------------------------------------------
# Pure-JAX reference (correctness check)
# ---------------------------------------------------------------------------
def _reference(x, weight, gamma, beta, rmean, rvar, *, stride=1, padding=None, eps=1e-5):
    K = weight.shape[-1]
    p = (K // 2) if padding is None else padding
    y = jax.lax.conv_general_dilated(
        x, weight, window_strides=(stride, stride), padding=[(p, p), (p, p)],
        dimension_numbers=("NCHW", "OIHW", "NCHW"))
    scale = gamma / jnp.sqrt(rvar + eps)
    bias = beta - rmean * scale
    y = y * scale[None, :, None, None] + bias[None, :, None, None]
    return y * jax.nn.sigmoid(y)


def _run_case(key, *, n, c1, c2, h, w, k, s):
    kx, kw_, kg, kb, km, kv = jax.random.split(key, 6)
    x = jax.random.normal(kx, (n, c1, h, w), dtype=jnp.float32)
    weight = jax.random.normal(kw_, (c2, c1, k, k), dtype=jnp.float32) * 0.1
    gamma = 1.0 + 0.1 * jax.random.normal(kg, (c2,), dtype=jnp.float32)
    beta = 0.1 * jax.random.normal(kb, (c2,), dtype=jnp.float32)
    rmean = 0.1 * jax.random.normal(km, (c2,), dtype=jnp.float32)
    rvar = 1.0 + 0.1 * jax.random.uniform(kv, (c2,), dtype=jnp.float32)

    out = conv_bn_silu(x, weight, gamma, beta, rmean, rvar, stride=s)
    out = jax.block_until_ready(out)
    ref = _reference(x, weight, gamma, beta, rmean, rvar, stride=s)
    assert out.shape == ref.shape, (out.shape, ref.shape)
    err = float(jnp.max(jnp.abs(out - ref)))
    assert err < 1e-3, (k, s, err)
    return err


if __name__ == "__main__":
    key = jax.random.PRNGKey(0)
    cases = [
        dict(n=2, c1=4,  c2=8,   h=16, w=16, k=3, s=1),  # im2col path, n_h=2
        dict(n=2, c1=4,  c2=8,   h=16, w=16, k=1, s=1),  # 1x1 conv
        dict(n=1, c1=4,  c2=8,   h=16, w=16, k=3, s=2),  # stride 2 -> space-to-depth, im2col
        dict(n=1, c1=32, c2=16,  h=16, w=16, k=3, s=2),  # stride 2, C1_eff=128 -> direct path
        dict(n=1, c1=4,  c2=256, h=16, w=16, k=3, s=1),  # C2 tiled into 2 x 128 blocks
    ]
    for case in cases:
        key, sub = jax.random.split(key)
        _run_case(sub, **case)
    print("KERNEL_OK")
</pallas_src>

<mosaic_0001>
module attributes {stable_mosaic.version = 11 : i64} {
  func.func @_conv_im2col_kernel(%arg0: i32, %arg1: i32, %arg2: i32, %arg3: memref<1x1x8x10x18xf32, #tpu.memory_space<vmem>>, %arg4: memref<8x72xf32, #tpu.memory_space<vmem>>, %arg5: memref<8x1xf32, #tpu.memory_space<vmem>>, %arg6: memref<1x8x128xf32, #tpu.memory_space<vmem>>, %arg7: memref<72x128xf32, #tpu.memory_space<vmem>>) attributes {dimension_semantics = [#tpu.dimension_semantics<parallel>, #tpu.dimension_semantics<parallel>, #tpu.dimension_semantics<arbitrary>], iteration_bounds = array<i64: 2, 2, 1>, scalar_prefetch = 0 : i64, scratch_operands = 1 : i64, tpu.core_type = #tpu.core_type<tc>, window_params = [{transform_indices = @transform_0, window_bounds = array<i64: 1, 1, 8, 10, 18>}, {transform_indices = @transform_1, window_bounds = array<i64: 8, 72>}, {transform_indices = @transform_2, window_bounds = array<i64: 8, 1>}, {transform_indices = @transform_3, window_bounds = array<i64: 1, 8, 128>}]} {
    %c0_i32 = arith.constant 0 : i32
    %0 = arith.cmpi eq, %arg2, %c0_i32 : i32
    %1 = arith.extui %0 : i1 to i32
    %c0_i32_0 = arith.constant 0 : i32
    %2 = arith.cmpi ne, %1, %c0_i32_0 : i32
    scf.if %2 {
      %c0_10 = arith.constant 0 : index
      %c0_11 = arith.constant 0 : index
      %c0_12 = arith.constant 0 : index
      %c0_13 = arith.constant 0 : index
      %c0_14 = arith.constant 0 : index
      %18 = vector.load %arg3[%c0_10, %c0_11, %c0_12, %c0_13, %c0_14] : memref<1x1x8x10x18xf32, #tpu.memory_space<vmem>>, vector<1x1x8x8x18xf32>
      %19 = vector.shape_cast %18 : vector<1x1x8x8x18xf32> to vector<8x8x18xf32>
      %20 = vector.extract_strided_slice %19 {offsets = [0, 0, 0], sizes = [8, 8, 16], strides = [1, 1, 1]} : vector<8x8x18xf32> to vector<8x8x16xf32>
      %21 = vector.shape_cast %20 : vector<8x8x16xf32> to vector<8x128xf32>
      %c0_15 = arith.constant 0 : index
      %c0_16 = arith.constant 0 : index
      %22 = vector.load %arg7[%c0_15, %c0_16] : memref<72x128xf32, #tpu.memory_space<vmem>>, vector<8x128xf32>
      tpu.vector_store %arg7[%c0_15, %c0_16], %21 {strides = array<i32>} : memref<72x128xf32, #tpu.memory_space<vmem>>, vector<8x128xf32>,
      %23 = vector.extract_strided_slice %19 {offsets = [0, 0, 1], sizes = [8, 8, 16], strides = [1, 1, 1]} : vector<8x8x18xf32> to vector<8x8x16xf32>
      %24 = vector.shape_cast %23 : vector<8x8x16xf32> to vector<8x128xf32>
      %c8 = arith.constant 8 : index
      %c0_17 = arith.constant 0 : index
      %25 = vector.load %arg7[%c8, %c0_17] : memref<72x128xf32, #tpu.memory_space<vmem>>, vector<8x128xf32>
      tpu.vector_store %arg7[%c8, %c0_17], %24 {strides = array<i32>} : memref<72x128xf32, #tpu.memory_space<vmem>>, vector<8x128xf32>,
      %26 = vector.extract_strided_slice %19 {offsets = [0, 0, 2], sizes = [8, 8, 16], strides = [1, 1, 1]} : vector<8x8x18xf32> to vector<8x8x16xf32>
      %27 = vector.shape_cast %26 : vector<8x8x16xf32> to vector<8x128xf32>
      %c16 = arith.constant 16 : index
      %c0_18 = arith.constant 0 : index
      %28 = vector.load %arg7[%c16, %c0_18] : memref<72x128xf32, #tpu.memory_space<vmem>>, vector<8x128xf32>
      tpu.vector_store %arg7[%c16, %c0_18], %27 {strides = array<i32>} : memref<72x128xf32, #tpu.memory_space<vmem>>, vector<8x128xf32>,
      %c0_19 = arith.constant 0 : index
      %c0_20 = arith.constant 0 : index
      %c0_21 = arith.constant 0 : index
      %c1 = arith.constant 1 : index
      %c0_22 = arith.constant 0 : index
      %29 = vector.load %arg3[%c0_19, %c0_20, %c0_21, %c1, %c0_22] : memref<1x1x8x10x18xf32, #tpu.memory_space<vmem>>, vector<1x1x8x8x18xf32>
      %30 = vector.shape_cast %29 : vector<1x1x8x8x18xf32> to vector<8x8x18xf32>
      %31 = vector.extract_strided_slice %30 {offsets = [0, 0, 0], sizes = [8, 8, 16], strides = [1, 1, 1]} : vector<8x8x18xf32> to vector<8x8x16xf32>
      %32 = vector.shape_cast %31 : vector<8x8x16xf32> to vector<8x128xf32>
      %c24 = arith.constant 24 : index
      %c0_23 = arith.constant 0 : index
      %33 = vector.load %arg7[%c24, %c0_23] : memref<72x128xf32, #tpu.memory_space<vmem>>, vector<8x128xf32>
      tpu.vector_store %arg7[%c24, %c0_23], %32 {strides = array<i32>} : memref<72x128xf32, #tpu.memory_space<vmem>>, vector<8x128xf32>,
      %34 = vector.extract_strided_slice %30 {offsets = [0, 0, 1], sizes = [8, 8, 16], strides = [1, 1, 1]} : vector<8x8x18xf32> to vector<8x8x16xf32>
      %35 = vector.shape_cast %34 : vector<8x8x16xf32> to vector<8x128xf32>
      %c32 = arith.constant 32 : index
      %c0_24 = arith.constant 0 : index
      %36 = vector.load %arg7[%c32, %c0_24] : memref<72x128xf32, #tpu.memory_space<vmem>>, vector<8x128xf32>
      tpu.vector_store %arg7[%c32, %c0_24], %35 {strides = array<i32>} : memref<72x128xf32, #tpu.memory_space<vmem>>, vector<8x128xf32>,
      %37 = vector.extract_strided_slice %30 {offsets = [0, 0, 2], sizes = [8, 8, 16], strides = [1, 1, 1]} : vector<8x8x18xf32> to vector<8x8x16xf32>
      %38 = vector.shape_cast %37 : vector<8x8x16xf32> to vector<8x128xf32>
      %c40 = arith.constant 40 : index
      %c0_25 = arith.constant 0 : index
      %39 = vector.load %arg7[%c40, %c0_25] : memref<72x128xf32, #tpu.memory_space<vmem>>, vector<8x128xf32>
      tpu.vector_store %arg7[%c40, %c0_25], %38 {strides = array<i32>} : memref<72x128xf32, #tpu.memory_space<vmem>>, vector<8x128xf32>,
      %c0_26 = arith.constant 0 : index
      %c0_27 = arith.constant 0 : index
      %c0_28 = arith.constant 0 : index
      %c2 = arith.constant 2 : index
      %c0_29 = arith.constant 0 : index
      %40 = vector.load %arg3[%c0_26, %c0_27, %c0_28, %c2, %c0_29] : memref<1x1x8x10x18xf32, #tpu.memory_space<vmem>>, vector<1x1x8x8x18xf32>
      %41 = vector.shape_cast %40 : vector<1x1x8x8x18xf32> to vector<8x8x18xf32>
      %42 = vector.extract_strided_slice %41 {offsets = [0, 0, 0], sizes = [8, 8, 16], strides = [1, 1, 1]} : vector<8x8x18xf32> to vector<8x8x16xf32>
      %43 = vector.shape_cast %42 : vector<8x8x16xf32> to vector<8x128xf32>
      %c48 = arith.constant 48 : index
      %c0_30 = arith.constant 0 : index
      %44 = vector.load %arg7[%c48, %c0_30] : memref<72x128xf32, #tpu.memory_space<vmem>>, vector<8x128xf32>
      tpu.vector_store %arg7[%c48, %c0_30], %43 {strides = array<i32>} : memref<72x128xf32, #tpu.memory_space<vmem>>, vector<8x128xf32>,
      %45 = vector.extract_strided_slice %41 {offsets = [0, 0, 1], sizes = [8, 8, 16], strides = [1, 1, 1]} : vector<8x8x18xf32> to vector<8x8x16xf32>
      %46 = vector.shape_cast %45 : vector<8x8x16xf32> to vector<8x128xf32>
      %c56 = arith.constant 56 : index
      %c0_31 = arith.constant 0 : index
      %47 = vector.load %arg7[%c56, %c0_31] : memref<72x128xf32, #tpu.memory_space<vmem>>, vector<8x128xf32>
      tpu.vector_store %arg7[%c56, %c0_31], %46 {strides = array<i32>} : memref<72x128xf32, #tpu.memory_space<vmem>>, vector<8x128xf32>,
      %48 = vector.extract_strided_slice %41 {offsets = [0, 0, 2], sizes = [8, 8, 16], strides = [1, 1, 1]} : vector<8x8x18xf32> to vector<8x8x16xf32>
      %49 = vector.shape_cast %48 : vector<8x8x16xf32> to vector<8x128xf32>
      %c64 = arith.constant 64 : index
      %c0_32 = arith.constant 0 : index
      %50 = vector.load %arg7[%c64, %c0_32] : memref<72x128xf32, #tpu.memory_space<vmem>>, vector<8x128xf32>
      tpu.vector_store %arg7[%c64, %c0_32], %49 {strides = array<i32>} : memref<72x128xf32, #tpu.memory_space<vmem>>, vector<8x128xf32>,
    } else {
    }
    %c0 = arith.constant 0 : index
    %c0_1 = arith.constant 0 : index
    %3 = vector.load %arg4[%c0, %c0_1] : memref<8x72xf32, #tpu.memory_space<vmem>>, vector<8x72xf32>
    %c0_2 = arith.constant 0 : index
    %c0_3 = arith.constant 0 : index
    %4 = vector.load %arg7[%c0_2, %c0_3] : memref<72x128xf32, #tpu.memory_space<vmem>>, vector<72x128xf32>
    %cst = arith.constant dense<0.000000e+00> : vector<8x128xf32>
    %5 = tpu.matmul %3, %4, %cst {dimension_numbers = #tpu.dot_dimension_numbers<[1], [0], [0], [1], [0, 0, 1, 1], [], []>} : vector<8x72xf32>, vector<72x128xf32>, vector<8x128xf32> -> vector<8x128xf32>
    %c0_4 = arith.constant 0 : index
    %c0_5 = arith.constant 0 : index
    %6 = vector.load %arg5[%c0_4, %c0_5] : memref<8x1xf32, #tpu.memory_space<vmem>>, vector<8x1xf32>
    %7 = vector.broadcast %6 : vector<8x1xf32> to vector<8x128xf32>
    %8 = arith.addf %5, %7 : vector<8x128xf32>
    %9 = arith.negf %8 : vector<8x128xf32>
    %10 = math.exp %9 : vector<8x128xf32>
    %cst_6 = arith.constant 1.000000e+00 : f32
    %11 = vector.broadcast %cst_6 : f32 to vector<8x128xf32>
    %12 = arith.addf %11, %10 : vector<8x128xf32>
    %13 = arith.divf %11, %12 : vector<8x128xf32>
    %14 = arith.mulf %8, %13 : vector<8x128xf32>
    %c0_7 = arith.constant 0 : index
    %c0_8 = arith.constant 0 : index
    %c0_9 = arith.constant 0 : index
    %15 = vector.load %arg6[%c0_7, %c0_8, %c0_9] : memref<1x8x128xf32, #tpu.memory_space<vmem>>, vector<1x8x128xf32>
    %16 = vector.shape_cast %15 : vector<1x8x128xf32> to vector<8x128xf32>
    %17 = vector.shape_cast %14 : vector<8x128xf32> to vector<1x8x128xf32>
    tpu.vector_store %arg6[%c0_7, %c0_8, %c0_9], %17 {strides = array<i32>} : memref<1x8x128xf32, #tpu.memory_space<vmem>>, vector<1x8x128xf32>,
    return
  }
  func.func @transform_0(%arg0: i32, %arg1: i32, %arg2: i32) -> (i32, i32, i32, i32, i32) {
    %c0_i32 = arith.constant 0 : i32
    %c0_i32_0 = arith.constant 0 : i32
    %c0_i32_1 = arith.constant 0 : i32
    %c0_i32_2 = arith.constant 0 : i32
    return %arg0, %arg1, %c0_i32, %c0_i32_0, %c0_i32_1 : i32, i32, i32, i32, i32
  }
  func.func @transform_1(%arg0: i32, %arg1: i32, %arg2: i32) -> (i32, i32) {
    %c0_i32 = arith.constant 0 : i32
    %c0_i32_0 = arith.constant 0 : i32
    return %arg2, %c0_i32 : i32, i32
  }
  func.func @transform_2(%arg0: i32, %arg1: i32, %arg2: i32) -> (i32, i32) {
    %c0_i32 = arith.constant 0 : i32
    %c0_i32_0 = arith.constant 0 : i32
    return %arg2, %c0_i32 : i32, i32
  }
  func.func @transform_3(%arg0: i32, %arg1: i32, %arg2: i32) -> (i32, i32, i32) {
    %c0_i32 = arith.constant 0 : i32
    return %arg0, %arg2, %arg1 : i32, i32, i32
  }
}

</mosaic_0001>

<llo_original>
// kernel: tpu_custom_call.1
$region0: #{tpu_custom_call.1}
  #allocation0 [shape = 'u32[]', space=smem, size = 0x4, offset = 0x4, fixed_abs, tag = 'smem constant byte address 0x4 - core index']
  #allocation1 [shape = 'u32[144,128]{1,0:T(1,128)}', space=vmem, size = 0x12000, scoped, tag = 'internal scratch']
  #allocation2 [shape = 'f32[72,128]{1,0:T(8,128)}', space=vmem, size = 0x9000, scoped, tag = 'scratch operand']
  %s0 = inlined_call_operand.vmem [shape: f32[2,2,8,10,18], index: 0, kind: input, shape index: {}]
  %s1 = inlined_call_operand.vmem [shape: f32[8,72], index: 1, kind: input, shape index: {}]
  %s2 = inlined_call_operand.vmem [shape: f32[8,1], index: 2, kind: input, shape index: {}]
  %s3 = inlined_call_operand.hbm [shape: f32[2,8,256], index: 3, kind: output, shape index: {}]
  %s4 = sld [smem:[#allocation0]]
  $region49: #{tpu_custom_call.1} parent=0
    _
  %s6 = ssub.s32 1, %s4
  %s7 = scalar_select 0, %s6, %s4
  $region1: #{tpu_custom_call.1} parent=0
    #allocation3 [shape = 'u8[8192]{0}', space=vmem, size = 0x2000, scoped, tag = 'output window, operand 0']
    #allocation4 [shape = 's32[2]{0}', space=sflag, size = 0x8, scoped, tag = 'scoped memory for tpu_custom_call.1']
    %8 = vsyncpa [#allocation4], 0
    %s9 = scalar_lea.sflag [#allocation4], 1
    %10 = vsyncpa %s9, 0
    loop: start=0, step=1, limit=6
    $region2: #{tpu_custom_call.1} parent=1 // loop_pre_header
      _
    $region3: #{tpu_custom_call.1} parent=1 // loop_header
      %s12 = sphi 0, %s16
      %p13 = scmp.ge.s32.totalorder %s12, 6
      %s19 = sphi 0, %s38
      %s20 = sphi 0, %s34
      %s21 = sphi 0, %s30
      %s22 = sphi 0, %s19
      %s23 = sphi 0, %s20
      %s24 = sphi 0, %s21
      %s25 = sphi 0, %s22
      %s26 = sphi 0, %s23
      %s27 = sphi 0, %s24
      %s43 = sphi 0, %s45
      %s46 = sphi 0, %s43
      %s47 = sphi 0, %s46
      %s63 = sphi 0, %s47
      %s69 = sphi 0, %s71
      %s72 = sphi 0, %s69
      %s73 = sphi 0, %s72
      %s89 = sphi 0, %s73
      %s95 = sphi 0, %s97
      %s98 = sphi 0, %s95
      %s99 = sphi 0, %s98
      %s115 = sphi 0, %s99
      %s125 = sphi 0, %s127
      %s128 = sphi 0, %s125
      %s129 = sphi 0, %s128
      %s145 = sphi 0, %s129
    $region4: #{tpu_custom_call.1} parent=1 // loop_header_branch
      %15 = sbr.rel (%p13) target = $region8
    $region5: #{tpu_custom_call.1} parent=1 // loop_body
      %s17 = ssub.s32 %s12, 1
      %s18 = ssub.s32 %s12, 2
      %s28 = sadd.s32 1, %s21
      %p29 = scmp.ge.s32.totalorder %s28, 1
      %s30 = scalar_select %p29, 0, %s28
      %s31 = sadd.s32 1, %s20
      %s32 = scalar_select %p29, %s31, %s20
      %p33 = scmp.ge.s32.totalorder %s32, 2
      %s34 = scalar_select %p33, 0, %s32
      %s35 = sadd.s32 1, %s19
      %s36 = scalar_select %p33, %s35, %s19
      %p37 = scmp.ge.s32.totalorder %s36, 2
      %s38 = scalar_select %p37, 0, %s36
      %s39 = ssub.s32 %s19, %s38
      %s40 = ssub.s32 %s20, %s34
      %s41 = sor.u32 %s39, %s40
      %p42 = scmp.eq.s32.totalorder %s41, 0
      %s44 = sadd.s32 %s43, 1
      %s45 = scalar_select %p42, %s43, %s44
      %p48 = pneg %p42
      %p49 = scmp.eq.s32.totalorder %s12, 3
      %p50 = por %p48, %p49
      %p51 = scmp.ne.s32.totalorder %s43, %s46
      %p52 = scmp.eq.s32.totalorder %s12, 0
      %p53 = por %p51, %p52
      %p54 = scmp.ne.s32.totalorder %s43, %s46
      %p55 = scmp.eq.s32.totalorder %s17, 3
      %p56 = por %p54, %p55
      %p57 = scmp.ne.s32.totalorder %s46, %s47
      %p58 = scmp.eq.s32.totalorder %s17, 0
      %p59 = por %p57, %p58
      %p60 = scmp.ne.s32.totalorder %s46, %s47
      %p61 = scmp.eq.s32.totalorder %s18, 3
      %p62 = por %p60, %p61
      %p64 = scmp.ne.s32.totalorder %s47, %s63
      %p65 = scmp.eq.s32.totalorder %s18, 0
      %p66 = por %p64, %p65
      %s67 = ssub.s32 %s21, %s30
      %p68 = scmp.eq.s32.totalorder %s67, 0
      %s70 = sadd.s32 %s69, 1
      %s71 = scalar_select %p68, %s69, %s70
      %p74 = pneg %p68
      %p75 = scmp.eq.s32.totalorder %s12, 3
      %p76 = por %p74, %p75
      %p77 = scmp.ne.s32.totalorder %s69, %s72
      %p78 = scmp.eq.s32.totalorder %s12, 0
      %p79 = por %p77, %p78
      %p80 = scmp.ne.s32.totalorder %s69, %s72
      %p81 = scmp.eq.s32.totalorder %s17, 3
      %p82 = por %p80, %p81
      %p83 = scmp.ne.s32.totalorder %s72, %s73
      %p84 = scmp.eq.s32.totalorder %s17, 0
      %p85 = por %p83, %p84
      %p86 = scmp.ne.s32.totalorder %s72, %s73
      %p87 = scmp.eq.s32.totalorder %s18, 3
      %p88 = por %p86, %p87
      %p90 = scmp.ne.s32.totalorder %s73, %s89
      %p91 = scmp.eq.s32.totalorder %s18, 0
      %p92 = por %p90, %p91
      %s93 = ssub.s32 %s21, %s30
      %p94 = scmp.eq.s32.totalorder %s93, 0
      %s96 = sadd.s32 %s95, 1
      %s97 = scalar_select %p94, %s95, %s96
      %p100 = pneg %p94
      %p101 = scmp.eq.s32.totalorder %s12, 3
      %p102 = por %p100, %p101
      %p103 = scmp.ne.s32.totalorder %s95, %s98
      %p104 = scmp.eq.s32.totalorder %s12, 0
      %p105 = por %p103, %p104
      %p106 = scmp.ne.s32.totalorder %s95, %s98
      %p107 = scmp.eq.s32.totalorder %s17, 3
      %p108 = por %p106, %p107
      %p109 = scmp.ne.s32.totalorder %s98, %s99
      %p110 = scmp.eq.s32.totalorder %s17, 0
      %p111 = por %p109, %p110
      %p112 = scmp.ne.s32.totalorder %s98, %s99
      %p113 = scmp.eq.s32.totalorder %s18, 3
      %p114 = por %p112, %p113
      %p116 = scmp.ne.s32.totalorder %s99, %s115
      %p117 = scmp.eq.s32.totalorder %s18, 0
      %p118 = por %p116, %p117
      %s119 = ssub.s32 %s19, %s38
      %s120 = ssub.s32 %s21, %s30
      %s121 = sor.u32 %s119, %s120
      %s122 = ssub.s32 %s20, %s34
      %s123 = sor.u32 %s121, %s122
      %p124 = scmp.eq.s32.totalorder %s123, 0
      %s126 = sadd.s32 %s125, 1
      %s127 = scalar_select %p124, %s125, %s126
      %p130 = pneg %p124
      %p131 = scmp.eq.s32.totalorder %s12, 3
      %p132 = por %p130, %p131
      %p133 = scmp.ne.s32.totalorder %s125, %s128
      %p134 = scmp.eq.s32.totalorder %s12, 0
      %p135 = por %p133, %p134
      %p136 = scmp.ne.s32.totalorder %s125, %s128
      %p137 = scmp.eq.s32.totalorder %s17, 3
      %p138 = por %p136, %p137
      %p139 = scmp.ne.s32.totalorder %s128, %s129
      %p140 = scmp.eq.s32.totalorder %s17, 0
      %p141 = por %p139, %p140
      %p142 = scmp.ne.s32.totalorder %s128, %s129
      %p143 = scmp.eq.s32.totalorder %s18, 3
      %p144 = por %p142, %p143
      %p146 = scmp.ne.s32.totalorder %s129, %s145
      %p147 = scmp.eq.s32.totalorder %s18, 0
      %p148 = por %p146, %p147
      %p149 = scmp.le.s32.totalorder 1, %s12
      %p150 = scmp.lt.s32.totalorder %s12, 5
      %p151 = pnand %p149, %p150
      %p152 = pneg %p151
      // Predicated region
      $region9: #{tpu_custom_call.1} parent=5 // pred_check
        _
      $region10: #{tpu_custom_call.1} parent=5 // pred_check_branch
        %154 = sbr.rel (%p151) target = $region12
      $region11: #{tpu_custom_call.1} parent=5 // pred_region
        %s155 = ssub.s32 %s12, 1
        // Predicated region
        $region13: #{tpu_custom_call.1} parent=11 // pred_check
          %p156 = pneg %p85
        $region14: #{tpu_custom_call.1} parent=11 // pred_check_branch
          %158 = sbr.rel (%p156) target = $region16
        $region15: #{tpu_custom_call.1} parent=11 // pred_region
          %p159 = scmp.lt.s32.totalorder %s24, 0
          %s160 = scalar_select %p159, %s24, 0
          %s161 = smul.addr %s160, 8
          %s162 = scalar_lea.vmem %s1, %s161
        $region16: #{tpu_custom_call.1} parent=11 // pred_fallthru
          _
        // Predicated region
        $region17: #{tpu_custom_call.1} parent=11 // pred_check
          %p163 = pneg %p111
        $region18: #{tpu_custom_call.1} parent=11 // pred_check_branch
          %165 = sbr.rel (%p163) target = $region20
        $region19: #{tpu_custom_call.1} parent=11 // pred_region
          %p166 = scmp.lt.s32.totalorder %s24, 0
          %s167 = scalar_select %p166, %s24, 0
          %s168 = smul.addr %s167, 8
          %s169 = scalar_lea.vmem %s2, %s168
        $region20: #{tpu_custom_call.1} parent=11 // pred_fallthru
          _
      $region12: #{tpu_custom_call.1} parent=5 // pred_fallthru
        _
      %p170 = scmp.lt.s32.totalorder %s12, 4
      // Predicated region
      $region21: #{tpu_custom_call.1} parent=5 // pred_check
        %p171 = pneg %p170
      $region22: #{tpu_custom_call.1} parent=5 // pred_check_branch
        %173 = sbr.rel (%p171) target = $region24
      $region23: #{tpu_custom_call.1} parent=5 // pred_region
        // Predicated region
        $region25: #{tpu_custom_call.1} parent=23 // pred_check
          %p174 = pneg %p53
        $region26: #{tpu_custom_call.1} parent=23 // pred_check_branch
          %176 = sbr.rel (%p174) target = $region28
        $region27: #{tpu_custom_call.1} parent=23 // pred_region
          %p177 = scmp.lt.s32.totalorder %s19, 1
          %s178 = scalar_select %p177, %s19, 1
          %p179 = scmp.lt.s32.totalorder %s20, 1
          %s180 = scalar_select %p179, %s20, 1
          %s181 = smul.addr %s180, 16
          %s182 = smul.addr %s178, 32
          %s183 = sadd.s32 %s181, %s182
          %s184 = smul.addr %s183, 8
          %s185 = scalar_lea.vmem %s0, %s184
        $region28: #{tpu_custom_call.1} parent=23 // pred_fallthru
          _
      $region24: #{tpu_custom_call.1} parent=5 // pred_fallthru
        _
      %p186 = scmp.le.s32.totalorder 1, %s12
      %p187 = scmp.lt.s32.totalorder %s12, 5
      %p188 = pnand %p186, %p187
      %p189 = pneg %p188
      // Predicated region
      $region29: #{tpu_custom_call.1} parent=5 // pred_check
        _
      $region30: #{tpu_custom_call.1} parent=5 // pred_check_branch
        %191 = sbr.rel (%p188) target = $region32
      $region31: #{tpu_custom_call.1} parent=5 // pred_region
        %s192 = ssub.s32 %s12, 1
        %p193 = scmp.lt.s32.totalorder %s22, 1
        %s194 = scalar_select %p193, %s22, 1
        %p195 = scmp.lt.s32.totalorder %s23, 1
        %s196 = scalar_select %p195, %s23, 1
        %s197 = smul.addr %s196, 16
        %s198 = smul.addr %s194, 32
        %s199 = sadd.s32 %s197, %s198
        %s200 = smul.addr %s199, 8
        %s201 = scalar_lea.vmem %s0, %s200
        %p202 = pneg %p59
        %p203 = pneg %p56
        %p204 = scmp.lt.s32.totalorder %s24, 0
        %s205 = scalar_select %p204, %s24, 0
        %s206 = smul.addr %s205, 8
        %s207 = scalar_lea.vmem %s1, %s206
        %p208 = pneg %p85
        %p209 = pneg %p82
        %p210 = scmp.lt.s32.totalorder %s24, 0
        %s211 = scalar_select %p210, %s24, 0
        %s212 = smul.addr %s211, 8
        %s213 = scalar_lea.vmem %s2, %s212
        %p214 = pneg %p111
        %p215 = pneg %p108
        %p216 = pneg %p141
        %p217 = pneg %p138
        %s218 = sand.u32 %s128, 1
        %s219 = scalar_lea.sflag [#allocation4], %s218
        %s220 = sand.u32 %s128, 1
        %s221 = smul.addr %s220, 8
        %s222 = scalar_lea.vmem [#allocation3], %s221
        %p223 = scmp.lt.s32.totalorder %s22, 1
        %s224 = scalar_select %p223, %s22, 1
        %p225 = scmp.lt.s32.totalorder %s23, 1
        %s226 = scalar_select %p225, %s23, 1
        %s227 = smul.addr %s226, 16
        %s228 = smul.addr %s224, 32
        %s229 = sadd.s32 %s227, %s228
        %s230 = smul.addr %s229, 8
        %s231 = scalar_lea.vmem %s0, %s230
        %p232 = scmp.lt.s32.totalorder %s24, 0
        %s233 = scalar_select %p232, %s24, 0
        %s234 = smul.addr %s233, 8
        %s235 = scalar_lea.vmem %s1, %s234
        %p236 = scmp.lt.s32.totalorder %s24, 0
        %s237 = scalar_select %p236, %s24, 0
        %s238 = smul.addr %s237, 8
        %s239 = scalar_lea.vmem %s2, %s238
        %p240 = scmp.eq.s32.totalorder %s24, 0
        // Predicated region
        $region33: #{tpu_custom_call.1} parent=31 // pred_check
          %p241 = pneg %p240
        $region34: #{tpu_custom_call.1} parent=31 // pred_check_branch
          %243 = sbr.rel (%p241) target = $region36
        $region35: #{tpu_custom_call.1} parent=31 // pred_region
          %v244 = vld [vmem:[%s231] sm:$0xff]
          %v245 = vld [vmem:[%s231 + $0x10] sm:$0xff]
          %v246 = vld [vmem:[%s231 + $0x20] sm:$0xff]
          %v247 = vld [vmem:[%s231 + $0x30] sm:$0xff]
          %v248 = vld [vmem:[%s231 + $0x40] sm:$0xff]
          %v249 = vld [vmem:[%s231 + $0x50] sm:$0xff]
          %v250 = vld [vmem:[%s231 + $0x60] sm:$0xff]
          %v251 = vld [vmem:[%s231 + $0x70] sm:$0xff]
          %v252 = vcombine.low %v244, %v246
          %v253 = vcombine.high %v244, %v246
          %v255 = vunpack.c.l.s4 1983009808
          %v256 = vunpack.c.0.s8 %v255
          %v257 = vlaneseq
          %v258 = vshrl.u32 %v257, 7
          %v259 = vsub.s32 %v256, %v258
          %v260 = vrot.slane %v252, %v259
          %v262 = vunpack.c.l.s4 1983009808
          %v263 = vunpack.c.0.s8 %v262
          %v264 = vlaneseq
          %v265 = vshrl.u32 %v264, 7
          %v266 = vsub.s32 %v263, %v265
          %v267 = vrot.slane %v253, %v266
          %v268 = vcombine.low %v245, %v247
          %v269 = vcombine.high %v245, %v247
          %v271 = vunpack.c.l.s4 1983009808
          %v272 = vunpack.c.0.s8 %v271
          %v273 = vlaneseq
          %v274 = vshrl.u32 %v273, 7
          %v275 = vsub.s32 %v272, %v274
          %v276 = vrot.slane %v268, %v275
          %v278 = vunpack.c.l.s4 1983009808
          %v279 = vunpack.c.0.s8 %v278
          %v280 = vlaneseq
          %v281 = vshrl.u32 %v280, 7
          %v282 = vsub.s32 %v279, %v281
          %v283 = vrot.slane %v269, %v282
          %v284 = vcombine.low %v248, %v250
          %v285 = vcombine.high %v248, %v250
          %v287 = vunpack.c.l.s4 1983009808
          %v288 = vunpack.c.0.s8 %v287
          %v289 = vlaneseq
          %v290 = vshrl.u32 %v289, 7
          %v291 = vsub.s32 %v288, %v290
          %v292 = vrot.slane %v284, %v291
          %v294 = vunpack.c.l.s4 1983009808
          %v295 = vunpack.c.0.s8 %v294
          %v296 = vlaneseq
          %v297 = vshrl.u32 %v296, 7
          %v298 = vsub.s32 %v295, %v297
          %v299 = vrot.slane %v285, %v298
          %v300 = vcombine.low %v249, %v251
          %v301 = vcombine.high %v249, %v251
          %v303 = vunpack.c.l.s4 1983009808
          %v304 = vunpack.c.0.s8 %v303
          %v305 = vlaneseq
          %v306 = vshrl.u32 %v305, 7
          %v307 = vsub.s32 %v304, %v306
          %v308 = vrot.slane %v300, %v307
          %v310 = vunpack.c.l.s4 1983009808
          %v311 = vunpack.c.0.s8 %v310
          %v312 = vlaneseq
          %v313 = vshrl.u32 %v312, 7
          %v314 = vsub.s32 %v311, %v313
          %v315 = vrot.slane %v301, %v314
          %v316 = vcombine.low %v260, %v276
          %v317 = vcombine.high %v260, %v276
          %v319 = vunpack.c.l.s4 1934713408
          %v320 = vunpack.c.0.s8 %v319
          %v321 = vlaneseq
          %v322 = vshrl.u32 %v321, 7
          %v323 = vsub.s32 %v320, %v322
          %v324 = vrot.slane %v316, %v323
          %v326 = vunpack.c.l.s4 1934713408
          %v327 = vunpack.c.0.s8 %v326
          %v328 = vlaneseq
          %v329 = vshrl.u32 %v328, 7
          %v330 = vsub.s32 %v327, %v329
          %v331 = vrot.slane %v317, %v330
          %v332 = vcombine.low %v267, %v283
          %v333 = vcombine.high %v267, %v283
          %v335 = vunpack.c.l.s4 1934713408
          %v336 = vunpack.c.0.s8 %v335
          %v337 = vlaneseq
          %v338 = vshrl.u32 %v337, 7
          %v339 = vsub.s32 %v336, %v338
          %v340 = vrot.slane %v332, %v339
          %v342 = vunpack.c.l.s4 1934713408
          %v343 = vunpack.c.0.s8 %v342
          %v344 = vlaneseq
          %v345 = vshrl.u32 %v344, 7
          %v346 = vsub.s32 %v343, %v345
          %v347 = vrot.slane %v333, %v346
          %v348 = vcombine.low %v292, %v308
          %v349 = vcombine.high %v292, %v308
          %v351 = vunpack.c.l.s4 1934713408
          %v352 = vunpack.c.0.s8 %v351
          %v353 = vlaneseq
          %v354 = vshrl.u32 %v353, 7
          %v355 = vsub.s32 %v352, %v354
          %v356 = vrot.slane %v348, %v355
          %v358 = vunpack.c.l.s4 1934713408
          %v359 = vunpack.c.0.s8 %v358
          %v360 = vlaneseq
          %v361 = vshrl.u32 %v360, 7
          %v362 = vsub.s32 %v359, %v361
          %v363 = vrot.slane %v349, %v362
          %v364 = vcombine.low %v299, %v315
          %v365 = vcombine.high %v299, %v315
          %v367 = vunpack.c.l.s4 1934713408
          %v368 = vunpack.c.0.s8 %v367
          %v369 = vlaneseq
          %v370 = vshrl.u32 %v369, 7
          %v371 = vsub.s32 %v368, %v370
          %v372 = vrot.slane %v364, %v371
          %v374 = vunpack.c.l.s4 1934713408
          %v375 = vunpack.c.0.s8 %v374
          %v376 = vlaneseq
          %v377 = vshrl.u32 %v376, 7
          %v378 = vsub.s32 %v375, %v377
          %v379 = vrot.slane %v365, %v378
          %v380 = vcombine.low %v324, %v356
          %v381 = vcombine.high %v324, %v356
          %v382 = vcombine.low %v331, %v363
          %v383 = vcombine.high %v331, %v363
          %v384 = vcombine.low %v340, %v372
          %v385 = vcombine.high %v340, %v372
          %v386 = vcombine.low %v347, %v379
          %v387 = vcombine.high %v347, %v379
          %389 = vrot.lane.b32.xlu0 %v381, 16
          %v390 = vpop.permute.xlu0 %389
          %393 = vrot.lane.b32.xlu0 %v382, 32
          %v394 = vpop.permute.xlu0 %393
          %397 = vrot.lane.b32.xlu0 %v383, 48
          %v398 = vpop.permute.xlu0 %397
          %401 = vrot.lane.b32.xlu0 %v384, 64
          %v402 = vpop.permute.xlu0 %401
          %405 = vrot.lane.b32.xlu0 %v385, 80
          %v406 = vpop.permute.xlu0 %405
          %409 = vrot.lane.b32.xlu0 %v386, 96
          %v410 = vpop.permute.xlu0 %409
          %413 = vrot.lane.b32.xlu0 %v387, 112
          %v414 = vpop.permute.xlu0 %413
          %vm416 = vcmask 130048
          %v417 = vsel %vm416, %v380, %v390
          %vm418 = vcmask 261120
          %v419 = vsel %vm418, %v417, %v394
          %vm420 = vcmask 392192
          %v421 = vsel %vm420, %v419, %v398
          %vm422 = vcmask 523264
          %v423 = vsel %vm422, %v421, %v402
          %vm424 = vcmask 654336
          %v425 = vsel %vm424, %v423, %v406
          %vm426 = vcmask 785408
          %v427 = vsel %vm426, %v425, %v410
          %vm428 = vcmask 916480
          %v429 = vsel %vm428, %v427, %v414
          %430 = vst [vmem:[#allocation2] sm:$0xff] %v429
          %439 = vrot.lane.b32.xlu0 %v244, 127
          %v440 = vpop.permute.xlu0 %439
          %441 = vrot.lane.b32.xlu0 %v245, 127
          %v442 = vpop.permute.xlu0 %441
          %443 = vrot.lane.b32.xlu0 %v246, 127
          %v444 = vpop.permute.xlu0 %443
          %445 = vrot.lane.b32.xlu0 %v247, 127
          %v446 = vpop.permute.xlu0 %445
          %447 = vrot.lane.b32.xlu0 %v248, 127
          %v448 = vpop.permute.xlu0 %447
          %449 = vrot.lane.b32.xlu0 %v249, 127
          %v450 = vpop.permute.xlu0 %449
          %451 = vrot.lane.b32.xlu0 %v250, 127
          %v452 = vpop.permute.xlu0 %451
          %453 = vrot.lane.b32.xlu0 %v251, 127
          %v454 = vpop.permute.xlu0 %453
          %v463 = vcombine.low %v440, %v444
          %v464 = vcombine.high %v440, %v444
          %v466 = vunpack.c.l.s4 1983009808
          %v467 = vunpack.c.0.s8 %v466
          %v468 = vlaneseq
          %v469 = vshrl.u32 %v468, 7
          %v470 = vsub.s32 %v467, %v469
          %v471 = vrot.slane %v463, %v470
          %v473 = vunpack.c.l.s4 1983009808
          %v474 = vunpack.c.0.s8 %v473
          %v475 = vlaneseq
          %v476 = vshrl.u32 %v475, 7
          %v477 = vsub.s32 %v474, %v476
          %v478 = vrot.slane %v464, %v477
          %v479 = vcombine.low %v442, %v446
          %v480 = vcombine.high %v442, %v446
          %v482 = vunpack.c.l.s4 1983009808
          %v483 = vunpack.c.0.s8 %v482
          %v484 = vlaneseq
          %v485 = vshrl.u32 %v484, 7
          %v486 = vsub.s32 %v483, %v485
          %v487 = vrot.slane %v479, %v486
          %v489 = vunpack.c.l.s4 1983009808
          %v490 = vunpack.c.0.s8 %v489
          %v491 = vlaneseq
          %v492 = vshrl.u32 %v491, 7
          %v493 = vsub.s32 %v490, %v492
          %v494 = vrot.slane %v480, %v493
          %v495 = vcombine.low %v448, %v452
          %v496 = vcombine.high %v448, %v452
          %v498 = vunpack.c.l.s4 1983009808
          %v499 = vunpack.c.0.s8 %v498
          %v500 = vlaneseq
          %v501 = vshrl.u32 %v500, 7
          %v502 = vsub.s32 %v499, %v501
          %v503 = vrot.slane %v495, %v502
          %v505 = vunpack.c.l.s4 1983009808
          %v506 = vunpack.c.0.s8 %v505
          %v507 = vlaneseq
          %v508 = vshrl.u32 %v507, 7
          %v509 = vsub.s32 %v506, %v508
          %v510 = vrot.slane %v496, %v509
          %v511 = vcombine.low %v450, %v454
          %v512 = vcombine.high %v450, %v454
          %v514 = vunpack.c.l.s4 1983009808
          %v515 = vunpack.c.0.s8 %v514
          %v516 = vlaneseq
          %v517 = vshrl.u32 %v516, 7
          %v518 = vsub.s32 %v515, %v517
          %v519 = vrot.slane %v511, %v518
          %v521 = vunpack.c.l.s4 1983009808
          %v522 = vunpack.c.0.s8 %v521
          %v523 = vlaneseq
          %v524 = vshrl.u32 %v523, 7
          %v525 = vsub.s32 %v522, %v524
          %v526 = vrot.slane %v512, %v525
          %v527 = vcombine.low %v471, %v487
          %v528 = vcombine.high %v471, %v487
          %v530 = vunpack.c.l.s4 1934713408
          %v531 = vunpack.c.0.s8 %v530
          %v532 = vlaneseq
          %v533 = vshrl.u32 %v532, 7
          %v534 = vsub.s32 %v531, %v533
          %v535 = vrot.slane %v527, %v534
          %v537 = vunpack.c.l.s4 1934713408
          %v538 = vunpack.c.0.s8 %v537
          %v539 = vlaneseq
          %v540 = vshrl.u32 %v539, 7
          %v541 = vsub.s32 %v538, %v540
          %v542 = vrot.slane %v528, %v541
          %v543 = vcombine.low %v478, %v494
          %v544 = vcombine.high %v478, %v494
          %v546 = vunpack.c.l.s4 1934713408
          %v547 = vunpack.c.0.s8 %v546
          %v548 = vlaneseq
          %v549 = vshrl.u32 %v548, 7
          %v550 = vsub.s32 %v547, %v549
          %v551 = vrot.slane %v543, %v550
          %v553 = vunpack.c.l.s4 1934713408
          %v554 = vunpack.c.0.s8 %v553
          %v555 = vlaneseq
          %v556 = vshrl.u32 %v555, 7
          %v557 = vsub.s32 %v554, %v556
          %v558 = vrot.slane %v544, %v557
          %v559 = vcombine.low %v503, %v519
          %v560 = vcombine.high %v503, %v519
          %v562 = vunpack.c.l.s4 1934713408
          %v563 = vunpack.c.0.s8 %v562
          %v564 = vlaneseq
          %v565 = vshrl.u32 %v564, 7
          %v566 = vsub.s32 %v563, %v565
          %v567 = vrot.slane %v559, %v566
          %v569 = vunpack.c.l.s4 1934713408
          %v570 = vunpack.c.0.s8 %v569
          %v571 = vlaneseq
          %v572 = vshrl.u32 %v571, 7
          %v573 = vsub.s32 %v570, %v572
          %v574 = vrot.slane %v560, %v573
          %v575 = vcombine.low %v510, %v526
          %v576 = vcombine.high %v510, %v526
          %v578 = vunpack.c.l.s4 1934713408
          %v579 = vunpack.c.0.s8 %v578
          %v580 = vlaneseq
          %v581 = vshrl.u32 %v580, 7
          %v582 = vsub.s32 %v579, %v581
          %v583 = vrot.slane %v575, %v582
          %v585 = vunpack.c.l.s4 1934713408
          %v586 = vunpack.c.0.s8 %v585
          %v587 = vlaneseq
          %v588 = vshrl.u32 %v587, 7
          %v589 = vsub.s32 %v586, %v588
          %v590 = vrot.slane %v576, %v589
          %v591 = vcombine.low %v535, %v567
          %v592 = vcombine.high %v535, %v567
          %v593 = vcombine.low %v542, %v574
          %v594 = vcombine.high %v542, %v574
          %v595 = vcombine.low %v551, %v583
          %v596 = vcombine.high %v551, %v583
          %v597 = vcombine.low %v558, %v590
          %v598 = vcombine.high %v558, %v590
          %600 = vrot.lane.b32.xlu0 %v592, 16
          %v601 = vpop.permute.xlu0 %600
          %604 = vrot.lane.b32.xlu0 %v593, 32
          %v605 = vpop.permute.xlu0 %604
          %608 = vrot.lane.b32.xlu0 %v594, 48
          %v609 = vpop.permute.xlu0 %608
          %612 = vrot.lane.b32.xlu0 %v595, 64
          %v613 = vpop.permute.xlu0 %612
          %616 = vrot.lane.b32.xlu0 %v596, 80
          %v617 = vpop.permute.xlu0 %616
          %620 = vrot.lane.b32.xlu0 %v597, 96
          %v621 = vpop.permute.xlu0 %620
          %624 = vrot.lane.b32.xlu0 %v598, 112
          %v625 = vpop.permute.xlu0 %624
          %v627 = vsel %vm416, %v591, %v601
          %v628 = vsel %vm418, %v627, %v605
          %v629 = vsel %vm420, %v628, %v609
          %v630 = vsel %vm422, %v629, %v613
          %v631 = vsel %vm424, %v630, %v617
          %v632 = vsel %vm426, %v631, %v621
          %v633 = vsel %vm428, %v632, %v625
          %634 = vst [vmem:[#allocation2 + $0x8] sm:$0xff] %v633
          %635 = vrot.lane.b32.xlu0 %v244, 126
          %v636 = vpop.permute.xlu0 %635
          %637 = vrot.lane.b32.xlu0 %v245, 126
          %v638 = vpop.permute.xlu0 %637
          %639 = vrot.lane.b32.xlu0 %v246, 126
          %v640 = vpop.permute.xlu0 %639
          %641 = vrot.lane.b32.xlu0 %v247, 126
          %v642 = vpop.permute.xlu0 %641
          %643 = vrot.lane.b32.xlu0 %v248, 126
          %v644 = vpop.permute.xlu0 %643
          %645 = vrot.lane.b32.xlu0 %v249, 126
          %v646 = vpop.permute.xlu0 %645
          %647 = vrot.lane.b32.xlu0 %v250, 126
          %v648 = vpop.permute.xlu0 %647
          %649 = vrot.lane.b32.xlu0 %v251, 126
          %v650 = vpop.permute.xlu0 %649
          %v659 = vcombine.low %v636, %v640
          %v660 = vcombine.high %v636, %v640
          %v662 = vunpack.c.l.s4 1983009808
          %v663 = vunpack.c.0.s8 %v662
          %v664 = vlaneseq
          %v665 = vshrl.u32 %v664, 7
          %v666 = vsub.s32 %v663, %v665
          %v667 = vrot.slane %v659, %v666
          %v669 = vunpack.c.l.s4 1983009808
          %v670 = vunpack.c.0.s8 %v669
          %v671 = vlaneseq
          %v672 = vshrl.u32 %v671, 7
          %v673 = vsub.s32 %v670, %v672
          %v674 = vrot.slane %v660, %v673
          %v675 = vcombine.low %v638, %v642
          %v676 = vcombine.high %v638, %v642
          %v678 = vunpack.c.l.s4 1983009808
          %v679 = vunpack.c.0.s8 %v678
          %v680 = vlaneseq
          %v681 = vshrl.u32 %v680, 7
          %v682 = vsub.s32 %v679, %v681
          %v683 = vrot.slane %v675, %v682
          %v685 = vunpack.c.l.s4 1983009808
          %v686 = vunpack.c.0.s8 %v685
          %v687 = vlaneseq
          %v688 = vshrl.u32 %v687, 7
          %v689 = vsub.s32 %v686, %v688
          %v690 = vrot.slane %v676, %v689
          %v691 = vcombine.low %v644, %v648
          %v692 = vcombine.high %v644, %v648
          %v694 = vunpack.c.l.s4 1983009808
          %v695 = vunpack.c.0.s8 %v694
          %v696 = vlaneseq
          %v697 = vshrl.u32 %v696, 7
          %v698 = vsub.s32 %v695, %v697
          %v699 = vrot.slane %v691, %v698
          %v701 = vunpack.c.l.s4 1983009808
          %v702 = vunpack.c.0.s8 %v701
          %v703 = vlaneseq
          %v704 = vshrl.u32 %v703, 7
          %v705 = vsub.s32 %v702, %v704
          %v706 = vrot.slane %v692, %v705
          %v707 = vcombine.low %v646, %v650
          %v708 = vcombine.high %v646, %v650
          %v710 = vunpack.c.l.s4 1983009808
          %v711 = vunpack.c.0.s8 %v710
          %v712 = vlaneseq
          %v713 = vshrl.u32 %v712, 7
          %v714 = vsub.s32 %v711, %v713
          %v715 = vrot.slane %v707, %v714
          %v717 = vunpack.c.l.s4 1983009808
          %v718 = vunpack.c.0.s8 %v717
          %v719 = vlaneseq
          %v720 = vshrl.u32 %v719, 7
          %v721 = vsub.s32 %v718, %v720
          %v722 = vrot.slane %v708, %v721
          %v723 = vcombine.low %v667, %v683
          %v724 = vcombine.high %v667, %v683
          %v726 = vunpack.c.l.s4 1934713408
          %v727 = vunpack.c.0.s8 %v726
          %v728 = vlaneseq
          %v729 = vshrl.u32 %v728, 7
          %v730 = vsub.s32 %v727, %v729
          %v731 = vrot.slane %v723, %v730
          %v733 = vunpack.c.l.s4 1934713408
          %v734 = vunpack.c.0.s8 %v733
          %v735 = vlaneseq
          %v736 = vshrl.u32 %v735, 7
          %v737 = vsub.s32 %v734, %v736
          %v738 = vrot.slane %v724, %v737
          %v739 = vcombine.low %v674, %v690
          %v740 = vcombine.high %v674, %v690
          %v742 = vunpack.c.l.s4 1934713408
          %v743 = vunpack.c.0.s8 %v742
          %v744 = vlaneseq
          %v745 = vshrl.u32 %v744, 7
          %v746 = vsub.s32 %v743, %v745
          %v747 = vrot.slane %v739, %v746
          %v749 = vunpack.c.l.s4 1934713408
          %v750 = vunpack.c.0.s8 %v749
          %v751 = vlaneseq
          %v752 = vshrl.u32 %v751, 7
          %v753 = vsub.s32 %v750, %v752
          %v754 = vrot.slane %v740, %v753
          %v755 = vcombine.low %v699, %v715
          %v756 = vcombine.high %v699, %v715
          %v758 = vunpack.c.l.s4 1934713408
          %v759 = vunpack.c.0.s8 %v758
          %v760 = vlaneseq
          %v761 = vshrl.u32 %v760, 7
          %v762 = vsub.s32 %v759, %v761
          %v763 = vrot.slane %v755, %v762
          %v765 = vunpack.c.l.s4 1934713408
          %v766 = vunpack.c.0.s8 %v765
          %v767 = vlaneseq
          %v768 = vshrl.u32 %v767, 7
          %v769 = vsub.s32 %v766, %v768
          %v770 = vrot.slane %v756, %v769
          %v771 = vcombine.low %v706, %v722
          %v772 = vcombine.high %v706, %v722
          %v774 = vunpack.c.l.s4 1934713408
          %v775 = vunpack.c.0.s8 %v774
          %v776 = vlaneseq
          %v777 = vshrl.u32 %v776, 7
          %v778 = vsub.s32 %v775, %v777
          %v779 = vrot.slane %v771, %v778
          %v781 = vunpack.c.l.s4 1934713408
          %v782 = vunpack.c.0.s8 %v781
          %v783 = vlaneseq
          %v784 = vshrl.u32 %v783, 7
          %v785 = vsub.s32 %v782, %v784
          %v786 = vrot.slane %v772, %v785
          %v787 = vcombine.low %v731, %v763
          %v788 = vcombine.high %v731, %v763
          %v789 = vcombine.low %v738, %v770
          %v790 = vcombine.high %v738, %v770
          %v791 = vcombine.low %v747, %v779
          %v792 = vcombine.high %v747, %v779
          %v793 = vcombine.low %v754, %v786
          %v794 = vcombine.high %v754, %v786
          %796 = vrot.lane.b32.xlu0 %v788, 16
          %v797 = vpop.permute.xlu0 %796
          %800 = vrot.lane.b32.xlu0 %v789, 32
          %v801 = vpop.permute.xlu0 %800
          %804 = vrot.lane.b32.xlu0 %v790, 48
          %v805 = vpop.permute.xlu0 %804
          %808 = vrot.lane.b32.xlu0 %v791, 64
          %v809 = vpop.permute.xlu0 %808
          %812 = vrot.lane.b32.xlu0 %v792, 80
          %v813 = vpop.permute.xlu0 %812
          %816 = vrot.lane.b32.xlu0 %v793, 96
          %v817 = vpop.permute.xlu0 %816
          %820 = vrot.lane.b32.xlu0 %v794, 112
          %v821 = vpop.permute.xlu0 %820
          %v823 = vsel %vm416, %v787, %v797
          %v824 = vsel %vm418, %v823, %v801
          %v825 = vsel %vm420, %v824, %v805
          %v826 = vsel %vm422, %v825, %v809
          %v827 = vsel %vm424, %v826, %v813
          %v828 = vsel %vm426, %v827, %v817
          %v829 = vsel %vm428, %v828, %v821
          %830 = vst [vmem:[#allocation2 + $0x10] sm:$0xff] %v829
          %v831 = vld [vmem:[%s231 + $0x1] sm:$0xff]
          %v832 = vld [vmem:[%s231 + $0x11] sm:$0xff]
          %v833 = vld [vmem:[%s231 + $0x21] sm:$0xff]
          %v834 = vld [vmem:[%s231 + $0x31] sm:$0xff]
          %v835 = vld [vmem:[%s231 + $0x41] sm:$0xff]
          %v836 = vld [vmem:[%s231 + $0x51] sm:$0xff]
          %v837 = vld [vmem:[%s231 + $0x61] sm:$0xff]
          %v838 = vld [vmem:[%s231 + $0x71] sm:$0xff]
          %v839 = vcombine.low %v831, %v833
          %v840 = vcombine.high %v831, %v833
          %v842 = vunpack.c.l.s4 1983009808
          %v843 = vunpack.c.0.s8 %v842
          %v844 = vlaneseq
          %v845 = vshrl.u32 %v844, 7
          %v846 = vsub.s32 %v843, %v845
          %v847 = vrot.slane %v839, %v846
          %v849 = vunpack.c.l.s4 1983009808
          %v850 = vunpack.c.0.s8 %v849
          %v851 = vlaneseq
          %v852 = vshrl.u32 %v851, 7
          %v853 = vsub.s32 %v850, %v852
          %v854 = vrot.slane %v840, %v853
          %v855 = vcombine.low %v832, %v834
          %v856 = vcombine.high %v832, %v834
          %v858 = vunpack.c.l.s4 1983009808
          %v859 = vunpack.c.0.s8 %v858
          %v860 = vlaneseq
          %v861 = vshrl.u32 %v860, 7
          %v862 = vsub.s32 %v859, %v861
          %v863 = vrot.slane %v855, %v862
          %v865 = vunpack.c.l.s4 1983009808
          %v866 = vunpack.c.0.s8 %v865
          %v867 = vlaneseq
          %v868 = vshrl.u32 %v867, 7
          %v869 = vsub.s32 %v866, %v868
          %v870 = vrot.slane %v856, %v869
          %v871 = vcombine.low %v835, %v837
          %v872 = vcombine.high %v835, %v837
          %v874 = vunpack.c.l.s4 1983009808
          %v875 = vunpack.c.0.s8 %v874
          %v876 = vlaneseq
          %v877 = vshrl.u32 %v876, 7
          %v878 = vsub.s32 %v875, %v877
          %v879 = vrot.slane %v871, %v878
          %v881 = vunpack.c.l.s4 1983009808
          %v882 = vunpack.c.0.s8 %v881
          %v883 = vlaneseq
          %v884 = vshrl.u32 %v883, 7
          %v885 = vsub.s32 %v882, %v884
          %v886 = vrot.slane %v872, %v885
          %v887 = vcombine.low %v836, %v838
          %v888 = vcombine.high %v836, %v838
          %v890 = vunpack.c.l.s4 1983009808
          %v891 = vunpack.c.0.s8 %v890
          %v892 = vlaneseq
          %v893 = vshrl.u32 %v892, 7
          %v894 = vsub.s32 %v891, %v893
          %v895 = vrot.slane %v887, %v894
          %v897 = vunpack.c.l.s4 1983009808
          %v898 = vunpack.c.0.s8 %v897
          %v899 = vlaneseq
          %v900 = vshrl.u32 %v899, 7
          %v901 = vsub.s32 %v898, %v900
          %v902 = vrot.slane %v888, %v901
          %v903 = vcombine.low %v847, %v863
          %v904 = vcombine.high %v847, %v863
          %v906 = vunpack.c.l.s4 1934713408
          %v907 = vunpack.c.0.s8 %v906
          %v908 = vlaneseq
          %v909 = vshrl.u32 %v908, 7
          %v910 = vsub.s32 %v907, %v909
          %v911 = vrot.slane %v903, %v910
          %v913 = vunpack.c.l.s4 1934713408
          %v914 = vunpack.c.0.s8 %v913
          %v915 = vlaneseq
          %v916 = vshrl.u32 %v915, 7
          %v917 = vsub.s32 %v914, %v916
          %v918 = vrot.slane %v904, %v917
          %v919 = vcombine.low %v854, %v870
          %v920 = vcombine.high %v854, %v870
          %v922 = vunpack.c.l.s4 1934713408
          %v923 = vunpack.c.0.s8 %v922
          %v924 = vlaneseq
          %v925 = vshrl.u32 %v924, 7
          %v926 = vsub.s32 %v923, %v925
          %v927 = vrot.slane %v919, %v926
          %v929 = vunpack.c.l.s4 1934713408
          %v930 = vunpack.c.0.s8 %v929
          %v931 = vlaneseq
          %v932 = vshrl.u32 %v931, 7
          %v933 = vsub.s32 %v930, %v932
          %v934 = vrot.slane %v920, %v933
          %v935 = vcombine.low %v879, %v895
          %v936 = vcombine.high %v879, %v895
          %v938 = vunpack.c.l.s4 1934713408
          %v939 = vunpack.c.0.s8 %v938
          %v940 = vlaneseq
          %v941 = vshrl.u32 %v940, 7
          %v942 = vsub.s32 %v939, %v941
          %v943 = vrot.slane %v935, %v942
          %v945 = vunpack.c.l.s4 1934713408
          %v946 = vunpack.c.0.s8 %v945
          %v947 = vlaneseq
          %v948 = vshrl.u32 %v947, 7
          %v949 = vsub.s32 %v946, %v948
          %v950 = vrot.slane %v936, %v949
          %v951 = vcombine.low %v886, %v902
          %v952 = vcombine.high %v886, %v902
          %v954 = vunpack.c.l.s4 1934713408
          %v955 = vunpack.c.0.s8 %v954
          %v956 = vlaneseq
          %v957 = vshrl.u32 %v956, 7
          %v958 = vsub.s32 %v955, %v957
          %v959 = vrot.slane %v951, %v958
          %v961 = vunpack.c.l.s4 1934713408
          %v962 = vunpack.c.0.s8 %v961
          %v963 = vlaneseq
          %v964 = vshrl.u32 %v963, 7
          %v965 = vsub.s32 %v962, %v964
          %v966 = vrot.slane %v952, %v965
          %v967 = vcombine.low %v911, %v943
          %v968 = vcombine.high %v911, %v943
          %v969 = vcombine.low %v918, %v950
          %v970 = vcombine.high %v918, %v950
          %v971 = vcombine.low %v927, %v959
          %v972 = vcombine.high %v927, %v959
          %v973 = vcombine.low %v934, %v966
          %v974 = vcombine.high %v934, %v966
          %976 = vrot.lane.b32.xlu0 %v968, 16
          %v977 = vpop.permute.xlu0 %976
          %980 = vrot.lane.b32.xlu0 %v969, 32
          %v981 = vpop.permute.xlu0 %980
          %984 = vrot.lane.b32.xlu0 %v970, 48
          %v985 = vpop.permute.xlu0 %984
          %988 = vrot.lane.b32.xlu0 %v971, 64
          %v989 = vpop.permute.xlu0 %988
          %992 = vrot.lane.b32.xlu0 %v972, 80
          %v993 = vpop.permute.xlu0 %992
          %996 = vrot.lane.b32.xlu0 %v973, 96
          %v997 = vpop.permute.xlu0 %996
          %1000 = vrot.lane.b32.xlu0 %v974, 112
          %v1001 = vpop.permute.xlu0 %1000
          %v1003 = vsel %vm416, %v967, %v977
          %v1004 = vsel %vm418, %v1003, %v981
          %v1005 = vsel %vm420, %v1004, %v985
          %v1006 = vsel %vm422, %v1005, %v989
          %v1007 = vsel %vm424, %v1006, %v993
          %v1008 = vsel %vm426, %v1007, %v997
          %v1009 = vsel %vm428, %v1008, %v1001
          %1010 = vst [vmem:[#allocation2 + $0x18] sm:$0xff] %v1009
          %1019 = vrot.lane.b32.xlu0 %v831, 127
          %v1020 = vpop.permute.xlu0 %1019
          %1021 = vrot.lane.b32.xlu0 %v832, 127
          %v1022 = vpop.permute.xlu0 %1021
          %1023 = vrot.lane.b32.xlu0 %v833, 127
          %v1024 = vpop.permute.xlu0 %1023
          %1025 = vrot.lane.b32.xlu0 %v834, 127
          %v1026 = vpop.permute.xlu0 %1025
          %1027 = vrot.lane.b32.xlu0 %v835, 127
          %v1028 = vpop.permute.xlu0 %1027
          %1029 = vrot.lane.b32.xlu0 %v836, 127
          %v1030 = vpop.permute.xlu0 %1029
          %1031 = vrot.lane.b32.xlu0 %v837, 127
          %v1032 = vpop.permute.xlu0 %1031
          %1033 = vrot.lane.b32.xlu0 %v838, 127
          %v1034 = vpop.permute.xlu0 %1033
          %v1043 = vcombine.low %v1020, %v1024
          %v1044 = vcombine.high %v1020, %v1024
          %v1046 = vunpack.c.l.s4 1983009808
          %v1047 = vunpack.c.0.s8 %v1046
          %v1048 = vlaneseq
          %v1049 = vshrl.u32 %v1048, 7
          %v1050 = vsub.s32 %v1047, %v1049
          %v1051 = vrot.slane %v1043, %v1050
          %v1053 = vunpack.c.l.s4 1983009808
          %v1054 = vunpack.c.0.s8 %v1053
          %v1055 = vlaneseq
          %v1056 = vshrl.u32 %v1055, 7
          %v1057 = vsub.s32 %v1054, %v1056
          %v1058 = vrot.slane %v1044, %v1057
          %v1059 = vcombine.low %v1022, %v1026
          %v1060 = vcombine.high %v1022, %v1026
          %v1062 = vunpack.c.l.s4 1983009808
          %v1063 = vunpack.c.0.s8 %v1062
          %v1064 = vlaneseq
          %v1065 = vshrl.u32 %v1064, 7
          %v1066 = vsub.s32 %v1063, %v1065
          %v1067 = vrot.slane %v1059, %v1066
          %v1069 = vunpack.c.l.s4 1983009808
          %v1070 = vunpack.c.0.s8 %v1069
          %v1071 = vlaneseq
          %v1072 = vshrl.u32 %v1071, 7
          %v1073 = vsub.s32 %v1070, %v1072
          %v1074 = vrot.slane %v1060, %v1073
          %v1075 = vcombine.low %v1028, %v1032
          %v1076 = vcombine.high %v1028, %v1032
          %v1078 = vunpack.c.l.s4 1983009808
          %v1079 = vunpack.c.0.s8 %v1078
          %v1080 = vlaneseq
          %v1081 = vshrl.u32 %v1080, 7
          %v1082 = vsub.s32 %v1079, %v1081
          %v1083 = vrot.slane %v1075, %v1082
          %v1085 = vunpack.c.l.s4 1983009808
          %v1086 = vunpack.c.0.s8 %v1085
          %v1087 = vlaneseq
          %v1088 = vshrl.u32 %v1087, 7
          %v1089 = vsub.s32 %v1086, %v1088
          %v1090 = vrot.slane %v1076, %v1089
          %v1091 = vcombine.low %v1030, %v1034
          %v1092 = vcombine.high %v1030, %v1034
          %v1094 = vunpack.c.l.s4 1983009808
          %v1095 = vunpack.c.0.s8 %v1094
          %v1096 = vlaneseq
          %v1097 = vshrl.u32 %v1096, 7
          %v1098 = vsub.s32 %v1095, %v1097
          %v1099 = vrot.slane %v1091, %v1098
          %v1101 = vunpack.c.l.s4 1983009808
          %v1102 = vunpack.c.0.s8 %v1101
          %v1103 = vlaneseq
          %v1104 = vshrl.u32 %v1103, 7
          %v1105 = vsub.s32 %v1102, %v1104
          %v1106 = vrot.slane %v1092, %v1105
          %v1107 = vcombine.low %v1051, %v1067
          %v1108 = vcombine.high %v1051, %v1067
          %v1110 = vunpack.c.l.s4 1934713408
          %v1111 = vunpack.c.0.s8 %v1110
          %v1112 = vlaneseq
          %v1113 = vshrl.u32 %v1112, 7
          %v1114 = vsub.s32 %v1111, %v1113
          %v1115 = vrot.slane %v1107, %v1114
          %v1117 = vunpack.c.l.s4 1934713408
          %v1118 = vunpack.c.0.s8 %v1117
          %v1119 = vlaneseq
          %v1120 = vshrl.u32 %v1119, 7
          %v1121 = vsub.s32 %v1118, %v1120
          %v1122 = vrot.slane %v1108, %v1121
          %v1123 = vcombine.low %v1058, %v1074
          %v1124 = vcombine.high %v1058, %v1074
          %v1126 = vunpack.c.l.s4 1934713408
          %v1127 = vunpack.c.0.s8 %v1126
          %v1128 = vlaneseq
          %v1129 = vshrl.u32 %v1128, 7
          %v1130 = vsub.s32 %v1127, %v1129
          %v1131 = vrot.slane %v1123, %v1130
          %v1133 = vunpack.c.l.s4 1934713408
          %v1134 = vunpack.c.0.s8 %v1133
          %v1135 = vlaneseq
          %v1136 = vshrl.u32 %v1135, 7
          %v1137 = vsub.s32 %v1134, %v1136
          %v1138 = vrot.slane %v1124, %v1137
          %v1139 = vcombine.low %v1083, %v1099
          %v1140 = vcombine.high %v1083, %v1099
          %v1142 = vunpack.c.l.s4 1934713408
          %v1143 = vunpack.c.0.s8 %v1142
          %v1144 = vlaneseq
          %v1145 = vshrl.u32 %v1144, 7
          %v1146 = vsub.s32 %v1143, %v1145
          %v1147 = vrot.slane %v1139, %v1146
          %v1149 = vunpack.c.l.s4 1934713408
          %v1150 = vunpack.c.0.s8 %v1149
          %v1151 = vlaneseq
          %v1152 = vshrl.u32 %v1151, 7
          %v1153 = vsub.s32 %v1150, %v1152
          %v1154 = vrot.slane %v1140, %v1153
          %v1155 = vcombine.low %v1090, %v1106
          %v1156 = vcombine.high %v1090, %v1106
          %v1158 = vunpack.c.l.s4 1934713408
          %v1159 = vunpack.c.0.s8 %v1158
          %v1160 = vlaneseq
          %v1161 = vshrl.u32 %v1160, 7
          %v1162 = vsub.s32 %v1159, %v1161
          %v1163 = vrot.slane %v1155, %v1162
          %v1165 = vunpack.c.l.s4 1934713408
          %v1166 = vunpack.c.0.s8 %v1165
          %v1167 = vlaneseq
          %v1168 = vshrl.u32 %v1167, 7
          %v1169 = vsub.s32 %v1166, %v1168
          %v1170 = vrot.slane %v1156, %v1169
          %v1171 = vcombine.low %v1115, %v1147
          %v1172 = vcombine.high %v1115, %v1147
          %v1173 = vcombine.low %v1122, %v1154
          %v1174 = vcombine.high %v1122, %v1154
          %v1175 = vcombine.low %v1131, %v1163
          %v1176 = vcombine.high %v1131, %v1163
          %v1177 = vcombine.low %v1138, %v1170
          %v1178 = vcombine.high %v1138, %v1170
          %1180 = vrot.lane.b32.xlu0 %v1172, 16
          %v1181 = vpop.permute.xlu0 %1180
          %1184 = vrot.lane.b32.xlu0 %v1173, 32
          %v1185 = vpop.permute.xlu0 %1184
          %1188 = vrot.lane.b32.xlu0 %v1174, 48
          %v1189 = vpop.permute.xlu0 %1188
          %1192 = vrot.lane.b32.xlu0 %v1175, 64
          %v1193 = vpop.permute.xlu0 %1192
          %1196 = vrot.lane.b32.xlu0 %v1176, 80
          %v1197 = vpop.permute.xlu0 %1196
          %1200 = vrot.lane.b32.xlu0 %v1177, 96
          %v1201 = vpop.permute.xlu0 %1200
          %1204 = vrot.lane.b32.xlu0 %v1178, 112
          %v1205 = vpop.permute.xlu0 %1204
          %v1207 = vsel %vm416, %v1171, %v1181
          %v1208 = vsel %vm418, %v1207, %v1185
          %v1209 = vsel %vm420, %v1208, %v1189
          %v1210 = vsel %vm422, %v1209, %v1193
          %v1211 = vsel %vm424, %v1210, %v1197
          %v1212 = vsel %vm426, %v1211, %v1201
          %v1213 = vsel %vm428, %v1212, %v1205
          %1214 = vst [vmem:[#allocation2 + $0x20] sm:$0xff] %v1213
          %1215 = vrot.lane.b32.xlu0 %v831, 126
          %v1216 = vpop.permute.xlu0 %1215
          %1217 = vrot.lane.b32.xlu0 %v832, 126
          %v1218 = vpop.permute.xlu0 %1217
          %1219 = vrot.lane.b32.xlu0 %v833, 126
          %v1220 = vpop.permute.xlu0 %1219
          %1221 = vrot.lane.b32.xlu0 %v834, 126
          %v1222 = vpop.permute.xlu0 %1221
          %1223 = vrot.lane.b32.xlu0 %v835, 126
          %v1224 = vpop.permute.xlu0 %1223
          %1225 = vrot.lane.b32.xlu0 %v836, 126
          %v1226 = vpop.permute.xlu0 %1225
          %1227 = vrot.lane.b32.xlu0 %v837, 126
          %v1228 = vpop.permute.xlu0 %1227
          %1229 = vrot.lane.b32.xlu0 %v838, 126
          %v1230 = vpop.permute.xlu0 %1229
          %v1239 = vcombine.low %v1216, %v1220
          %v1240 = vcombine.high %v1216, %v1220
          %v1242 = vunpack.c.l.s4 1983009808
          %v1243 = vunpack.c.0.s8 %v1242
          %v1244 = vlaneseq
          %v1245 = vshrl.u32 %v1244, 7
          %v1246 = vsub.s32 %v1243, %v1245
          %v1247 = vrot.slane %v1239, %v1246
          %v1249 = vunpack.c.l.s4 1983009808
          %v1250 = vunpack.c.0.s8 %v1249
          %v1251 = vlaneseq
          %v1252 = vshrl.u32 %v1251, 7
          %v1253 = vsub.s32 %v1250, %v1252
          %v1254 = vrot.slane %v1240, %v1253
          %v1255 = vcombine.low %v1218, %v1222
          %v1256 = vcombine.high %v1218, %v1222
          %v1258 = vunpack.c.l.s4 1983009808
          %v1259 = vunpack.c.0.s8 %v1258
          %v1260 = vlaneseq
          %v1261 = vshrl.u32 %v1260, 7
          %v1262 = vsub.s32 %v1259, %v1261
          %v1263 = vrot.slane %v1255, %v1262
          %v1265 = vunpack.c.l.s4 1983009808
          %v1266 = vunpack.c.0.s8 %v1265
          %v1267 = vlaneseq
          %v1268 = vshrl.u32 %v1267, 7
          %v1269 = vsub.s32 %v1266, %v1268
          %v1270 = vrot.slane %v1256, %v1269
          %v1271 = vcombine.low %v1224, %v1228
          %v1272 = vcombine.high %v1224, %v1228
          %v1274 = vunpack.c.l.s4 1983009808
          %v1275 = vunpack.c.0.s8 %v1274
          %v1276 = vlaneseq
          %v1277 = vshrl.u32 %v1276, 7
          %v1278 = vsub.s32 %v1275, %v1277
          %v1279 = vrot.slane %v1271, %v1278
          %v1281 = vunpack.c.l.s4 1983009808
          %v1282 = vunpack.c.0.s8 %v1281
          %v1283 = vlaneseq
          %v1284 = vshrl.u32 %v1283, 7
          %v1285 = vsub.s32 %v1282, %v1284
          %v1286 = vrot.slane %v1272, %v1285
          %v1287 = vcombine.low %v1226, %v1230
          %v1288 = vcombine.high %v1226, %v1230
          %v1290 = vunpack.c.l.s4 1983009808
          %v1291 = vunpack.c.0.s8 %v1290
          %v1292 = vlaneseq
          %v1293 = vshrl.u32 %v1292, 7
          %v1294 = vsub.s32 %v1291, %v1293
          %v1295 = vrot.slane %v1287, %v1294
          %v1297 = vunpack.c.l.s4 1983009808
          %v1298 = vunpack.c.0.s8 %v1297
          %v1299 = vlaneseq
          %v1300 = vshrl.u32 %v1299, 7
          %v1301 = vsub.s32 %v1298, %v1300
          %v1302 = vrot.slane %v1288, %v1301
          %v1303 = vcombine.low %v1247, %v1263
          %v1304 = vcombine.high %v1247, %v1263
          %v1306 = vunpack.c.l.s4 1934713408
          %v1307 = vunpack.c.0.s8 %v1306
          %v1308 = vlaneseq
          %v1309 = vshrl.u32 %v1308, 7
          %v1310 = vsub.s32 %v1307, %v1309
          %v1311 = vrot.slane %v1303, %v1310
          %v1313 = vunpack.c.l.s4 1934713408
          %v1314 = vunpack.c.0.s8 %v1313
          %v1315 = vlaneseq
          %v1316 = vshrl.u32 %v1315, 7
          %v1317 = vsub.s32 %v1314, %v1316
          %v1318 = vrot.slane %v1304, %v1317
          %v1319 = vcombine.low %v1254, %v1270
          %v1320 = vcombine.high %v1254, %v1270
          %v1322 = vunpack.c.l.s4 1934713408
          %v1323 = vunpack.c.0.s8 %v1322
          %v1324 = vlaneseq
          %v1325 = vshrl.u32 %v1324, 7
          %v1326 = vsub.s32 %v1323, %v1325
          %v1327 = vrot.slane %v1319, %v1326
          %v1329 = vunpack.c.l.s4 1934713408
          %v1330 = vunpack.c.0.s8 %v1329
          %v1331 = vlaneseq
          %v1332 = vshrl.u32 %v1331, 7
          %v1333 = vsub.s32 %v1330, %v1332
          %v1334 = vrot.slane %v1320, %v1333
          %v1335 = vcombine.low %v1279, %v1295
          %v1336 = vcombine.high %v1279, %v1295
          %v1338 = vunpack.c.l.s4 1934713408
          %v1339 = vunpack.c.0.s8 %v1338
          %v1340 = vlaneseq
          %v1341 = vshrl.u32 %v1340, 7
          %v1342 = vsub.s32 %v1339, %v1341
          %v1343 = vrot.slane %v1335, %v1342
          %v1345 = vunpack.c.l.s4 1934713408
          %v1346 = vunpack.c.0.s8 %v1345
          %v1347 = vlaneseq
          %v1348 = vshrl.u32 %v1347, 7
          %v1349 = vsub.s32 %v1346, %v1348
          %v1350 = vrot.slane %v1336, %v1349
          %v1351 = vcombine.low %v1286, %v1302
          %v1352 = vcombine.high %v1286, %v1302
          %v1354 = vunpack.c.l.s4 1934713408
          %v1355 = vunpack.c.0.s8 %v1354
          %v1356 = vlaneseq
          %v1357 = vshrl.u32 %v1356, 7
          %v1358 = vsub.s32 %v1355, %v1357
          %v1359 = vrot.slane %v1351, %v1358
          %v1361 = vunpack.c.l.s4 1934713408
          %v1362 = vunpack.c.0.s8 %v1361
          %v1363 = vlaneseq
          %v1364 = vshrl.u32 %v1363, 7
          %v1365 = vsub.s32 %v1362, %v1364
          %v1366 = vrot.slane %v1352, %v1365
          %v1367 = vcombine.low %v1311, %v1343
          %v1368 = vcombine.high %v1311, %v1343
          %v1369 = vcombine.low %v1318, %v1350
          %v1370 = vcombine.high %v1318, %v1350
          %v1371 = vcombine.low %v1327, %v1359
          %v1372 = vcombine.high %v1327, %v1359
          %v1373 = vcombine.low %v1334, %v1366
          %v1374 = vcombine.high %v1334, %v1366
          %1376 = vrot.lane.b32.xlu0 %v1368, 16
          %v1377 = vpop.permute.xlu0 %1376
          %1380 = vrot.lane.b32.xlu0 %v1369, 32
          %v1381 = vpop.permute.xlu0 %1380
          %1384 = vrot.lane.b32.xlu0 %v1370, 48
          %v1385 = vpop.permute.xlu0 %1384
          %1388 = vrot.lane.b32.xlu0 %v1371, 64
          %v1389 = vpop.permute.xlu0 %1388
          %1392 = vrot.lane.b32.xlu0 %v1372, 80
          %v1393 = vpop.permute.xlu0 %1392
          %1396 = vrot.lane.b32.xlu0 %v1373, 96
          %v1397 = vpop.permute.xlu0 %1396
          %1400 = vrot.lane.b32.xlu0 %v1374, 112
          %v1401 = vpop.permute.xlu0 %1400
          %v1403 = vsel %vm416, %v1367, %v1377
          %v1404 = vsel %vm418, %v1403, %v1381
          %v1405 = vsel %vm420, %v1404, %v1385
          %v1406 = vsel %vm422, %v1405, %v1389
          %v1407 = vsel %vm424, %v1406, %v1393
          %v1408 = vsel %vm426, %v1407, %v1397
          %v1409 = vsel %vm428, %v1408, %v1401
          %1410 = vst [vmem:[#allocation2 + $0x28] sm:$0xff] %v1409
          %v1411 = vld [vmem:[%s231 + $0x2] sm:$0xff]
          %v1412 = vld [vmem:[%s231 + $0x12] sm:$0xff]
          %v1413 = vld [vmem:[%s231 + $0x22] sm:$0xff]
          %v1414 = vld [vmem:[%s231 + $0x32] sm:$0xff]
          %v1415 = vld [vmem:[%s231 + $0x42] sm:$0xff]
          %v1416 = vld [vmem:[%s231 + $0x52] sm:$0xff]
          %v1417 = vld [vmem:[%s231 + $0x62] sm:$0xff]
          %v1418 = vld [vmem:[%s231 + $0x72] sm:$0xff]
          %v1419 = vcombine.low %v1411, %v1413
          %v1420 = vcombine.high %v1411, %v1413
          %v1422 = vunpack.c.l.s4 1983009808
          %v1423 = vunpack.c.0.s8 %v1422
          %v1424 = vlaneseq
          %v1425 = vshrl.u32 %v1424, 7
          %v1426 = vsub.s32 %v1423, %v1425
          %v1427 = vrot.slane %v1419, %v1426
          %v1429 = vunpack.c.l.s4 1983009808
          %v1430 = vunpack.c.0.s8 %v1429
          %v1431 = vlaneseq
          %v1432 = vshrl.u32 %v1431, 7
          %v1433 = vsub.s32 %v1430, %v1432
          %v1434 = vrot.slane %v1420, %v1433
          %v1435 = vcombine.low %v1412, %v1414
          %v1436 = vcombine.high %v1412, %v1414
          %v1438 = vunpack.c.l.s4 1983009808
          %v1439 = vunpack.c.0.s8 %v1438
          %v1440 = vlaneseq
          %v1441 = vshrl.u32 %v1440, 7
          %v1442 = vsub.s32 %v1439, %v1441
          %v1443 = vrot.slane %v1435, %v1442
          %v1445 = vunpack.c.l.s4 1983009808
          %v1446 = vunpack.c.0.s8 %v1445
          %v1447 = vlaneseq
          %v1448 = vshrl.u32 %v1447, 7
          %v1449 = vsub.s32 %v1446, %v1448
          %v1450 = vrot.slane %v1436, %v1449
          %v1451 = vcombine.low %v1415, %v1417
          %v1452 = vcombine.high %v1415, %v1417
          %v1454 = vunpack.c.l.s4 1983009808
          %v1455 = vunpack.c.0.s8 %v1454
          %v1456 = vlaneseq
          %v1457 = vshrl.u32 %v1456, 7
          %v1458 = vsub.s32 %v1455, %v1457
          %v1459 = vrot.slane %v1451, %v1458
          %v1461 = vunpack.c.l.s4 1983009808
          %v1462 = vunpack.c.0.s8 %v1461
          %v1463 = vlaneseq
          %v1464 = vshrl.u32 %v1463, 7
          %v1465 = vsub.s32 %v1462, %v1464
          %v1466 = vrot.slane %v1452, %v1465
          %v1467 = vcombine.low %v1416, %v1418
          %v1468 = vcombine.high %v1416, %v1418
          %v1470 = vunpack.c.l.s4 1983009808
          %v1471 = vunpack.c.0.s8 %v1470
          %v1472 = vlaneseq
          %v1473 = vshrl.u32 %v1472, 7
          %v1474 = vsub.s32 %v1471, %v1473
          %v1475 = vrot.slane %v1467, %v1474
          %v1477 = vunpack.c.l.s4 1983009808
          %v1478 = vunpack.c.0.s8 %v1477
          %v1479 = vlaneseq
          %v1480 = vshrl.u32 %v1479, 7
          %v1481 = vsub.s32 %v1478, %v1480
          %v1482 = vrot.slane %v1468, %v1481
          %v1483 = vcombine.low %v1427, %v1443
          %v1484 = vcombine.high %v1427, %v1443
          %v1486 = vunpack.c.l.s4 1934713408
          %v1487 = vunpack.c.0.s8 %v1486
          %v1488 = vlaneseq
          %v1489 = vshrl.u32 %v1488, 7
          %v1490 = vsub.s32 %v1487, %v1489
          %v1491 = vrot.slane %v1483, %v1490
          %v1493 = vunpack.c.l.s4 1934713408
          %v1494 = vunpack.c.0.s8 %v1493
          %v1495 = vlaneseq
          %v1496 = vshrl.u32 %v1495, 7
          %v1497 = vsub.s32 %v1494, %v1496
          %v1498 = vrot.slane %v1484, %v1497
          %v1499 = vcombine.low %v1434, %v1450
          %v1500 = vcombine.high %v1434, %v1450
          %v1502 = vunpack.c.l.s4 1934713408
          %v1503 = vunpack.c.0.s8 %v1502
          %v1504 = vlaneseq
          %v1505 = vshrl.u32 %v1504, 7
          %v1506 = vsub.s32 %v1503, %v1505
          %v1507 = vrot.slane %v1499, %v1506
          %v1509 = vunpack.c.l.s4 1934713408
          %v1510 = vunpack.c.0.s8 %v1509
          %v1511 = vlaneseq
          %v1512 = vshrl.u32 %v1511, 7
          %v1513 = vsub.s32 %v1510, %v1512
          %v1514 = vrot.slane %v1500, %v1513
          %v1515 = vcombine.low %v1459, %v1475
          %v1516 = vcombine.high %v1459, %v1475
          %v1518 = vunpack.c.l.s4 1934713408
          %v1519 = vunpack.c.0.s8 %v1518
          %v1520 = vlaneseq
          %v1521 = vshrl.u32 %v1520, 7
          %v1522 = vsub.s32 %v1519, %v1521
          %v1523 = vrot.slane %v1515, %v1522
          %v1525 = vunpack.c.l.s4 1934713408
          %v1526 = vunpack.c.0.s8 %v1525
          %v1527 = vlaneseq
          %v1528 = vshrl.u32 %v1527, 7
          %v1529 = vsub.s32 %v1526, %v1528
          %v1530 = vrot.slane %v1516, %v1529
          %v1531 = vcombine.low %v1466, %v1482
          %v1532 = vcombine.high %v1466, %v1482
          %v1534 = vunpack.c.l.s4 1934713408
          %v1535 = vunpack.c.0.s8 %v1534
          %v1536 = vlaneseq
          %v1537 = vshrl.u32 %v1536, 7
          %v1538 = vsub.s32 %v1535, %v1537
          %v1539 = vrot.slane %v1531, %v1538
          %v1541 = vunpack.c.l.s4 1934713408
          %v1542 = vunpack.c.0.s8 %v1541
          %v1543 = vlaneseq
          %v1544 = vshrl.u32 %v1543, 7
          %v1545 = vsub.s32 %v1542, %v1544
          %v1546 = vrot.slane %v1532, %v1545
          %v1547 = vcombine.low %v1491, %v1523
          %v1548 = vcombine.high %v1491, %v1523
          %v1549 = vcombine.low %v1498, %v1530
          %v1550 = vcombine.high %v1498, %v1530
          %v1551 = vcombine.low %v1507, %v1539
          %v1552 = vcombine.high %v1507, %v1539
          %v1553 = vcombine.low %v1514, %v1546
          %v1554 = vcombine.high %v1514, %v1546
          %1556 = vrot.lane.b32.xlu0 %v1548, 16
          %v1557 = vpop.permute.xlu0 %1556
          %1560 = vrot.lane.b32.xlu0 %v1549, 32
          %v1561 = vpop.permute.xlu0 %1560
          %1564 = vrot.lane.b32.xlu0 %v1550, 48
          %v1565 = vpop.permute.xlu0 %1564
          %1568 = vrot.lane.b32.xlu0 %v1551, 64
          %v1569 = vpop.permute.xlu0 %1568
          %1572 = vrot.lane.b32.xlu0 %v1552, 80
          %v1573 = vpop.permute.xlu0 %1572
          %1576 = vrot.lane.b32.xlu0 %v1553, 96
          %v1577 = vpop.permute.xlu0 %1576
          %1580 = vrot.lane.b32.xlu0 %v1554, 112
          %v1581 = vpop.permute.xlu0 %1580
          %v1583 = vsel %vm416, %v1547, %v1557
          %v1584 = vsel %vm418, %v1583, %v1561
          %v1585 = vsel %vm420, %v1584, %v1565
          %v1586 = vsel %vm422, %v1585, %v1569
          %v1587 = vsel %vm424, %v1586, %v1573
          %v1588 = vsel %vm426, %v1587, %v1577
          %v1589 = vsel %vm428, %v1588, %v1581
          %1590 = vst [vmem:[#allocation2 + $0x30] sm:$0xff] %v1589
          %1599 = vrot.lane.b32.xlu0 %v1411, 127
          %v1600 = vpop.permute.xlu0 %1599
          %1601 = vrot.lane.b32.xlu0 %v1412, 127
          %v1602 = vpop.permute.xlu0 %1601
          %1603 = vrot.lane.b32.xlu0 %v1413, 127
          %v1604 = vpop.permute.xlu0 %1603
          %1605 = vrot.lane.b32.xlu0 %v1414, 127
          %v1606 = vpop.permute.xlu0 %1605
          %1607 = vrot.lane.b32.xlu0 %v1415, 127
          %v1608 = vpop.permute.xlu0 %1607
          %1609 = vrot.lane.b32.xlu0 %v1416, 127
          %v1610 = vpop.permute.xlu0 %1609
          %1611 = vrot.lane.b32.xlu0 %v1417, 127
          %v1612 = vpop.permute.xlu0 %1611
          %1613 = vrot.lane.b32.xlu0 %v1418, 127
          %v1614 = vpop.permute.xlu0 %1613
          %v1623 = vcombine.low %v1600, %v1604
          %v1624 = vcombine.high %v1600, %v1604
          %v1626 = vunpack.c.l.s4 1983009808
          %v1627 = vunpack.c.0.s8 %v1626
          %v1628 = vlaneseq
          %v1629 = vshrl.u32 %v1628, 7
          %v1630 = vsub.s32 %v1627, %v1629
          %v1631 = vrot.slane %v1623, %v1630
          %v1633 = vunpack.c.l.s4 1983009808
          %v1634 = vunpack.c.0.s8 %v1633
          %v1635 = vlaneseq
          %v1636 = vshrl.u32 %v1635, 7
          %v1637 = vsub.s32 %v1634, %v1636
          %v1638 = vrot.slane %v1624, %v1637
          %v1639 = vcombine.low %v1602, %v1606
          %v1640 = vcombine.high %v1602, %v1606
          %v1642 = vunpack.c.l.s4 1983009808
          %v1643 = vunpack.c.0.s8 %v1642
          %v1644 = vlaneseq
          %v1645 = vshrl.u32 %v1644, 7
          %v1646 = vsub.s32 %v1643, %v1645
          %v1647 = vrot.slane %v1639, %v1646
          %v1649 = vunpack.c.l.s4 1983009808
          %v1650 = vunpack.c.0.s8 %v1649
          %v1651 = vlaneseq
          %v1652 = vshrl.u32 %v1651, 7
          %v1653 = vsub.s32 %v1650, %v1652
          %v1654 = vrot.slane %v1640, %v1653
          %v1655 = vcombine.low %v1608, %v1612
          %v1656 = vcombine.high %v1608, %v1612
          %v1658 = vunpack.c.l.s4 1983009808
          %v1659 = vunpack.c.0.s8 %v1658
          %v1660 = vlaneseq
          %v1661 = vshrl.u32 %v1660, 7
          %v1662 = vsub.s32 %v1659, %v1661
          %v1663 = vrot.slane %v1655, %v1662
          %v1665 = vunpack.c.l.s4 1983009808
          %v1666 = vunpack.c.0.s8 %v1665
          %v1667 = vlaneseq
          %v1668 = vshrl.u32 %v1667, 7
          %v1669 = vsub.s32 %v1666, %v1668
          %v1670 = vrot.slane %v1656, %v1669
          %v1671 = vcombine.low %v1610, %v1614
          %v1672 = vcombine.high %v1610, %v1614
          %v1674 = vunpack.c.l.s4 1983009808
          %v1675 = vunpack.c.0.s8 %v1674
          %v1676 = vlaneseq
          %v1677 = vshrl.u32 %v1676, 7
          %v1678 = vsub.s32 %v1675, %v1677
          %v1679 = vrot.slane %v1671, %v1678
          %v1681 = vunpack.c.l.s4 1983009808
          %v1682 = vunpack.c.0.s8 %v1681
          %v1683 = vlaneseq
          %v1684 = vshrl.u32 %v1683, 7
          %v1685 = vsub.s32 %v1682, %v1684
          %v1686 = vrot.slane %v1672, %v1685
          %v1687 = vcombine.low %v1631, %v1647
          %v1688 = vcombine.high %v1631, %v1647
          %v1690 = vunpack.c.l.s4 1934713408
          %v1691 = vunpack.c.0.s8 %v1690
          %v1692 = vlaneseq
          %v1693 = vshrl.u32 %v1692, 7
          %v1694 = vsub.s32 %v1691, %v1693
          %v1695 = vrot.slane %v1687, %v1694
          %v1697 = vunpack.c.l.s4 1934713408
          %v1698 = vunpack.c.0.s8 %v1697
          %v1699 = vlaneseq
          %v1700 = vshrl.u32 %v1699, 7
          %v1701 = vsub.s32 %v1698, %v1700
          %v1702 = vrot.slane %v1688, %v1701
          %v1703 = vcombine.low %v1638, %v1654
          %v1704 = vcombine.high %v1638, %v1654
          %v1706 = vunpack.c.l.s4 1934713408
          %v1707 = vunpack.c.0.s8 %v1706
          %v1708 = vlaneseq
          %v1709 = vshrl.u32 %v1708, 7
          %v1710 = vsub.s32 %v1707, %v1709
          %v1711 = vrot.slane %v1703, %v1710
          %v1713 = vunpack.c.l.s4 1934713408
          %v1714 = vunpack.c.0.s8 %v1713
          %v1715 = vlaneseq
          %v1716 = vshrl.u32 %v1715, 7
          %v1717 = vsub.s32 %v1714, %v1716
          %v1718 = vrot.slane %v1704, %v1717
          %v1719 = vcombine.low %v1663, %v1679
          %v1720 = vcombine.high %v1663, %v1679
          %v1722 = vunpack.c.l.s4 1934713408
          %v1723 = vunpack.c.0.s8 %v1722
          %v1724 = vlaneseq
          %v1725 = vshrl.u32 %v1724, 7
          %v1726 = vsub.s32 %v1723, %v1725
          %v1727 = vrot.slane %v1719, %v1726
          %v1729 = vunpack.c.l.s4 1934713408
          %v1730 = vunpack.c.0.s8 %v1729
          %v1731 = vlaneseq
          %v1732 = vshrl.u32 %v1731, 7
          %v1733 = vsub.s32 %v1730, %v1732
          %v1734 = vrot.slane %v1720, %v1733
          %v1735 = vcombine.low %v1670, %v1686
          %v1736 = vcombine.high %v1670, %v1686
          %v1738 = vunpack.c.l.s4 1934713408
          %v1739 = vunpack.c.0.s8 %v1738
          %v1740 = vlaneseq
          %v1741 = vshrl.u32 %v1740, 7
          %v1742 = vsub.s32 %v1739, %v1741
          %v1743 = vrot.slane %v1735, %v1742
          %v1745 = vunpack.c.l.s4 1934713408
          %v1746 = vunpack.c.0.s8 %v1745
          %v1747 = vlaneseq
          %v1748 = vshrl.u32 %v1747, 7
          %v1749 = vsub.s32 %v1746, %v1748
          %v1750 = vrot.slane %v1736, %v1749
          %v1751 = vcombine.low %v1695, %v1727
          %v1752 = vcombine.high %v1695, %v1727
          %v1753 = vcombine.low %v1702, %v1734
          %v1754 = vcombine.high %v1702, %v1734
          %v1755 = vcombine.low %v1711, %v1743
          %v1756 = vcombine.high %v1711, %v1743
          %v1757 = vcombine.low %v1718, %v1750
          %v1758 = vcombine.high %v1718, %v1750
          %1760 = vrot.lane.b32.xlu0 %v1752, 16
          %v1761 = vpop.permute.xlu0 %1760
          %1764 = vrot.lane.b32.xlu0 %v1753, 32
          %v1765 = vpop.permute.xlu0 %1764
          %1768 = vrot.lane.b32.xlu0 %v1754, 48
          %v1769 = vpop.permute.xlu0 %1768
          %1772 = vrot.lane.b32.xlu0 %v1755, 64
          %v1773 = vpop.permute.xlu0 %1772
          %1776 = vrot.lane.b32.xlu0 %v1756, 80
          %v1777 = vpop.permute.xlu0 %1776
          %1780 = vrot.lane.b32.xlu0 %v1757, 96
          %v1781 = vpop.permute.xlu0 %1780
          %1784 = vrot.lane.b32.xlu0 %v1758, 112
          %v1785 = vpop.permute.xlu0 %1784
          %v1787 = vsel %vm416, %v1751, %v1761
          %v1788 = vsel %vm418, %v1787, %v1765
          %v1789 = vsel %vm420, %v1788, %v1769
          %v1790 = vsel %vm422, %v1789, %v1773
          %v1791 = vsel %vm424, %v1790, %v1777
          %v1792 = vsel %vm426, %v1791, %v1781
          %v1793 = vsel %vm428, %v1792, %v1785
          %1794 = vst [vmem:[#allocation2 + $0x38] sm:$0xff] %v1793
          %1795 = vrot.lane.b32.xlu0 %v1411, 126
          %v1796 = vpop.permute.xlu0 %1795
          %1797 = vrot.lane.b32.xlu0 %v1412, 126
          %v1798 = vpop.permute.xlu0 %1797
          %1799 = vrot.lane.b32.xlu0 %v1413, 126
          %v1800 = vpop.permute.xlu0 %1799
          %1801 = vrot.lane.b32.xlu0 %v1414, 126
          %v1802 = vpop.permute.xlu0 %1801
          %1803 = vrot.lane.b32.xlu0 %v1415, 126
          %v1804 = vpop.permute.xlu0 %1803
          %1805 = vrot.lane.b32.xlu0 %v1416, 126
          %v1806 = vpop.permute.xlu0 %1805
          %1807 = vrot.lane.b32.xlu0 %v1417, 126
          %v1808 = vpop.permute.xlu0 %1807
          %1809 = vrot.lane.b32.xlu0 %v1418, 126
          %v1810 = vpop.permute.xlu0 %1809
          %v1819 = vcombine.low %v1796, %v1800
          %v1820 = vcombine.high %v1796, %v1800
          %v1822 = vunpack.c.l.s4 1983009808
          %v1823 = vunpack.c.0.s8 %v1822
          %v1824 = vlaneseq
          %v1825 = vshrl.u32 %v1824, 7
          %v1826 = vsub.s32 %v1823, %v1825
          %v1827 = vrot.slane %v1819, %v1826
          %v1829 = vunpack.c.l.s4 1983009808
          %v1830 = vunpack.c.0.s8 %v1829
          %v1831 = vlaneseq
          %v1832 = vshrl.u32 %v1831, 7
          %v1833 = vsub.s32 %v1830, %v1832
          %v1834 = vrot.slane %v1820, %v1833
          %v1835 = vcombine.low %v1798, %v1802
          %v1836 = vcombine.high %v1798, %v1802
          %v1838 = vunpack.c.l.s4 1983009808
          %v1839 = vunpack.c.0.s8 %v1838
          %v1840 = vlaneseq
          %v1841 = vshrl.u32 %v1840, 7
          %v1842 = vsub.s32 %v1839, %v1841
          %v1843 = vrot.slane %v1835, %v1842
          %v1845 = vunpack.c.l.s4 1983009808
          %v1846 = vunpack.c.0.s8 %v1845
          %v1847 = vlaneseq
          %v1848 = vshrl.u32 %v1847, 7
          %v1849 = vsub.s32 %v1846, %v1848
          %v1850 = vrot.slane %v1836, %v1849
          %v1851 = vcombine.low %v1804, %v1808
          %v1852 = vcombine.high %v1804, %v1808
          %v1854 = vunpack.c.l.s4 1983009808
          %v1855 = vunpack.c.0.s8 %v1854
          %v1856 = vlaneseq
          %v1857 = vshrl.u32 %v1856, 7
          %v1858 = vsub.s32 %v1855, %v1857
          %v1859 = vrot.slane %v1851, %v1858
          %v1861 = vunpack.c.l.s4 1983009808
          %v1862 = vunpack.c.0.s8 %v1861
          %v1863 = vlaneseq
          %v1864 = vshrl.u32 %v1863, 7
          %v1865 = vsub.s32 %v1862, %v1864
          %v1866 = vrot.slane %v1852, %v1865
          %v1867 = vcombine.low %v1806, %v1810
          %v1868 = vcombine.high %v1806, %v1810
          %v1870 = vunpack.c.l.s4 1983009808
          %v1871 = vunpack.c.0.s8 %v1870
          %v1872 = vlaneseq
          %v1873 = vshrl.u32 %v1872, 7
          %v1874 = vsub.s32 %v1871, %v1873
          %v1875 = vrot.slane %v1867, %v1874
          %v1877 = vunpack.c.l.s4 1983009808
          %v1878 = vunpack.c.0.s8 %v1877
          %v1879 = vlaneseq
          %v1880 = vshrl.u32 %v1879, 7
          %v1881 = vsub.s32 %v1878, %v1880
          %v1882 = vrot.slane %v1868, %v1881
          %v1883 = vcombine.low %v1827, %v1843
          %v1884 = vcombine.high %v1827, %v1843
          %v1886 = vunpack.c.l.s4 1934713408
          %v1887 = vunpack.c.0.s8 %v1886
          %v1888 = vlaneseq
          %v1889 = vshrl.u32 %v1888, 7
          %v1890 = vsub.s32 %v1887, %v1889
          %v1891 = vrot.slane %v1883, %v1890
          %v1893 = vunpack.c.l.s4 1934713408
          %v1894 = vunpack.c.0.s8 %v1893
          %v1895 = vlaneseq
          %v1896 = vshrl.u32 %v1895, 7
          %v1897 = vsub.s32 %v1894, %v1896
          %v1898 = vrot.slane %v1884, %v1897
          %v1899 = vcombine.low %v1834, %v1850
          %v1900 = vcombine.high %v1834, %v1850
          %v1902 = vunpack.c.l.s4 1934713408
          %v1903 = vunpack.c.0.s8 %v1902
          %v1904 = vlaneseq
          %v1905 = vshrl.u32 %v1904, 7
          %v1906 = vsub.s32 %v1903, %v1905
          %v1907 = vrot.slane %v1899, %v1906
          %v1909 = vunpack.c.l.s4 1934713408
          %v1910 = vunpack.c.0.s8 %v1909
          %v1911 = vlaneseq
          %v1912 = vshrl.u32 %v1911, 7
          %v1913 = vsub.s32 %v1910, %v1912
          %v1914 = vrot.slane %v1900, %v1913
          %v1915 = vcombine.low %v1859, %v1875
          %v1916 = vcombine.high %v1859, %v1875
          %v1918 = vunpack.c.l.s4 1934713408
          %v1919 = vunpack.c.0.s8 %v1918
          %v1920 = vlaneseq
          %v1921 = vshrl.u32 %v1920, 7
          %v1922 = vsub.s32 %v1919, %v1921
          %v1923 = vrot.slane %v1915, %v1922
          %v1925 = vunpack.c.l.s4 1934713408
          %v1926 = vunpack.c.0.s8 %v1925
          %v1927 = vlaneseq
          %v1928 = vshrl.u32 %v1927, 7
          %v1929 = vsub.s32 %v1926, %v1928
          %v1930 = vrot.slane %v1916, %v1929
          %v1931 = vcombine.low %v1866, %v1882
          %v1932 = vcombine.high %v1866, %v1882
          %v1934 = vunpack.c.l.s4 1934713408
          %v1935 = vunpack.c.0.s8 %v1934
          %v1936 = vlaneseq
          %v1937 = vshrl.u32 %v1936, 7
          %v1938 = vsub.s32 %v1935, %v1937
          %v1939 = vrot.slane %v1931, %v1938
          %v1941 = vunpack.c.l.s4 1934713408
          %v1942 = vunpack.c.0.s8 %v1941
          %v1943 = vlaneseq
          %v1944 = vshrl.u32 %v1943, 7
          %v1945 = vsub.s32 %v1942, %v1944
          %v1946 = vrot.slane %v1932, %v1945
          %v1947 = vcombine.low %v1891, %v1923
          %v1948 = vcombine.high %v1891, %v1923
          %v1949 = vcombine.low %v1898, %v1930
          %v1950 = vcombine.high %v1898, %v1930
          %v1951 = vcombine.low %v1907, %v1939
          %v1952 = vcombine.high %v1907, %v1939
          %v1953 = vcombine.low %v1914, %v1946
          %v1954 = vcombine.high %v1914, %v1946
          %1956 = vrot.lane.b32.xlu0 %v1948, 16
          %v1957 = vpop.permute.xlu0 %1956
          %1960 = vrot.lane.b32.xlu0 %v1949, 32
          %v1961 = vpop.permute.xlu0 %1960
          %1964 = vrot.lane.b32.xlu0 %v1950, 48
          %v1965 = vpop.permute.xlu0 %1964
          %1968 = vrot.lane.b32.xlu0 %v1951, 64
          %v1969 = vpop.permute.xlu0 %1968
          %1972 = vrot.lane.b32.xlu0 %v1952, 80
          %v1973 = vpop.permute.xlu0 %1972
          %1976 = vrot.lane.b32.xlu0 %v1953, 96
          %v1977 = vpop.permute.xlu0 %1976
          %1980 = vrot.lane.b32.xlu0 %v1954, 112
          %v1981 = vpop.permute.xlu0 %1980
          %v1983 = vsel %vm416, %v1947, %v1957
          %v1984 = vsel %vm418, %v1983, %v1961
          %v1985 = vsel %vm420, %v1984, %v1965
          %v1986 = vsel %vm422, %v1985, %v1969
          %v1987 = vsel %vm424, %v1986, %v1973
          %v1988 = vsel %vm426, %v1987, %v1977
          %v1989 = vsel %vm428, %v1988, %v1981
          %1990 = vst [vmem:[#allocation2 + $0x40] sm:$0xff] %v1989
        $region36: #{tpu_custom_call.1} parent=31 // pred_fallthru
          _
        %v1991 = vld [vmem:[%s235] sm:$0xff]
        %v1992 = vld [vmem:[#allocation2] sm:$0xff]
        %v1993 = vld [vmem:[#allocation2 + $0x8] sm:$0xff]
        %v1994 = vld [vmem:[#allocation2 + $0x10] sm:$0xff]
        %v1995 = vld [vmem:[#allocation2 + $0x18] sm:$0xff]
        %v1996 = vld [vmem:[#allocation2 + $0x20] sm:$0xff]
        %v1997 = vld [vmem:[#allocation2 + $0x28] sm:$0xff]
        %v1998 = vld [vmem:[#allocation2 + $0x30] sm:$0xff]
        %v1999 = vld [vmem:[#allocation2 + $0x38] sm:$0xff]
        %v2000 = vld [vmem:[#allocation2 + $0x40] sm:$0xff]
        %v2001 = vld [vmem:[%s239] sm:$0xff]
        %2003 = vset.pattern.permute.xlu0 0
        %2004 = vperm.xlu0 %2003, %v2001
        %v2005 = vpop.permute.xlu0 %2004
        %vm2007 = vcmask 588800
        %v2009 = vsel %vm2007, %v1991, 0
        %2011 = vmatprep.subr.mxu0 0.0
        %2012 = vmatpush1.msra.mxu0 0.0
        %2013 = vmatprep.subr.mxu0 0.0
        %2014 = vmatpush1.msra.mxu0 0.0
        %2015 = vmatprep.subr.mxu0 0.0
        %2016 = vmatpush1.msra.mxu0 0.0
        %2017 = vmatprep.subr.mxu0 0.0
        %2018 = vmatpush1.msra.mxu0 0.0
        %2019 = vmatprep.subr.mxu0 0.0
        %2020 = vmatpush1.msra.mxu0 0.0
        %2021 = vmatprep.subr.mxu0 0.0
        %2022 = vmatpush1.msra.mxu0 0.0
        %2023 = vmatprep.subr.mxu0 0.0
        %2024 = vmatpush1.msra.mxu0 0.0
        %2025 = vmatprep.subr.mxu0 0.0
        %2026 = vmatpush1.msra.mxu0 %v2000
        %2027 = vmatprep.subr.mxu0 0.0
        %2028 = vmatpush1.msra.mxu0 %v1999
        %2029 = vmatprep.subr.mxu0 0.0
        %2030 = vmatpush1.msra.mxu0 %v1998
        %2031 = vmatprep.subr.mxu0 0.0
        %2032 = vmatpush1.msra.mxu0 %v1997
        %2033 = vmatprep.subr.mxu0 0.0
        %2034 = vmatpush1.msra.mxu0 %v1996
        %2035 = vmatprep.subr.mxu0 0.0
        %2036 = vmatpush1.msra.mxu0 %v1995
        %2037 = vmatprep.subr.mxu0 0.0
        %2038 = vmatpush1.msra.mxu0 %v1994
        %2039 = vmatprep.subr.mxu0 0.0
        %2040 = vmatpush1.msra.mxu0 %v1993
        %2041 = vmatprep.subr.mxu0 0.0
        %2042 = vmatpush1.msra.mxu0 %v1992
        %2043 = vmatprep.subr.mxu0 0.0
        %2044 = vmatpush2.msra.mxu0 0.0
        %2045 = vmatprep.subr.mxu0 0.0
        %2046 = vmatpush2.msra.mxu0 0.0
        %2047 = vmatprep.subr.mxu0 0.0
        %2048 = vmatpush2.msra.mxu0 0.0
        %2049 = vmatprep.subr.mxu0 0.0
        %2050 = vmatpush2.msra.mxu0 0.0
        %2051 = vmatprep.subr.mxu0 0.0
        %2052 = vmatpush2.msra.mxu0 0.0
        %2053 = vmatprep.subr.mxu0 0.0
        %2054 = vmatpush2.msra.mxu0 0.0
        %2055 = vmatprep.subr.mxu0 0.0
        %2056 = vmatpush2.msra.mxu0 0.0
        %2057 = vmatprep.subr.mxu0 0.0
        %2058 = vmatpush2.msra.mxu0 0.0
        %2059 = vmatprep.subr.mxu0 0.0
        %2060 = vmatpush2.msra.mxu0 0.0
        %2061 = vmatprep.subr.mxu0 0.0
        %2062 = vmatpush2.msra.mxu0 0.0
        %2063 = vmatprep.subr.mxu0 0.0
        %2064 = vmatpush2.msra.mxu0 0.0
        %2065 = vmatprep.subr.mxu0 0.0
        %2066 = vmatpush2.msra.mxu0 0.0
        %2067 = vmatprep.subr.mxu0 0.0
        %2068 = vmatpush2.msra.mxu0 0.0
        %2069 = vmatprep.subr.mxu0 0.0
        %2070 = vmatpush2.msra.mxu0 0.0
        %2071 = vmatprep.subr.mxu0 0.0
        %2072 = vmatpush2.msra.mxu0 0.0
        %2073 = vmatprep.subr.mxu0 0.0
        %2074 = vmatpush2.msra.mxu0 0.0
        %2075 = vmatprep.mubr.f32.mxu0 0.0
        %2076 = vmatmul.mubr.f32.gmra.mxu0 %v2009
        %v2077 = vpop.f32.mrf.mxu0
        %v2078 = vadd.f32 %v2005, %v2077
        %v2079 = vpop.f32.mrf.mxu0
        %2080 = vdwg.mxu0
        %v2081 = vxor.u32 %v2078, 2147483648
        %v2082 = vmul.f32 %v2081, 1.442695
        %v2083 = vpow.pop %v2082
        %v2084 = vadd.f32 %v2083, 1.0
        %v2085 = vrcp.pop %v2084
        %v2086 = vmul.f32 1.0, %v2085
        %v2087 = vmul.f32 %v2078, %v2086
        %2088 = vst [vmem:[%s222] sm:$0xff] %v2087
        %s2089 = sand.u32 %s128, 1
        %s2090 = scalar_lea.sflag [#allocation4], %s2089
        %s2091 = sand.u32 %s128, 1
        %s2092 = smul.addr %s2091, 8
        %s2093 = scalar_lea.vmem [#allocation3], %s2092
        // Predicated region
        $region37: #{tpu_custom_call.1} parent=31 // pred_check
          %p2094 = pneg %p138
        $region38: #{tpu_custom_call.1} parent=31 // pred_check_branch
          %2096 = sbr.rel (%p2094) target = $region40
        $region39: #{tpu_custom_call.1} parent=31 // pred_region
          %s2098 = ssub.s32 128, 128
          %2099 = vsyncadd %s2090, %s2098
          %s2100 = smul.addr %s24, 2
          %s2101 = sadd.s32 %s23, %s2100
          %s2102 = smul.addr %s22, 2
          %s2103 = sadd.s32 %s2101, %s2102
          %s2104 = smul.addr %s2103, 128
          %s2105 = scalar_lea.hbm %s3, %s2104
          %s2107 = sshll.u32 %s2093, 4
          %s2108 = int_to_ptr.vmem [resolvable:$true] %s2107
          %2110 = dma.vmem_to_hbm [thread:$0]  %s2108, 128, %s2105, %s2090
        $region40: #{tpu_custom_call.1} parent=31 // pred_fallthru
          _
      $region32: #{tpu_custom_call.1} parent=5 // pred_fallthru
        _
      %p2111 = scmp.le.s32.totalorder 2, %s12
      // Predicated region
      $region41: #{tpu_custom_call.1} parent=5 // pred_check
        %p2112 = pneg %p2111
      $region42: #{tpu_custom_call.1} parent=5 // pred_check_branch
        %2114 = sbr.rel (%p2112) target = $region44
      $region43: #{tpu_custom_call.1} parent=5 // pred_region
        %s2115 = ssub.s32 %s12, 2
        // Predicated region
        $region45: #{tpu_custom_call.1} parent=43 // pred_check
          %p2116 = pneg %p144
        $region46: #{tpu_custom_call.1} parent=43 // pred_check_branch
          %2118 = sbr.rel (%p2116) target = $region48
        $region47: #{tpu_custom_call.1} parent=43 // pred_region
          %s2119 = sand.u32 %s129, 1
          %s2120 = scalar_lea.sflag [#allocation4], %s2119
          %s2121 = sand.u32 %s129, 1
          %s2122 = smul.addr %s2121, 8
          %s2123 = scalar_lea.vmem [#allocation3], %s2122
          %2124 = dma.done %s2120, 128
        $region48: #{tpu_custom_call.1} parent=43 // pred_fallthru
          _
      $region44: #{tpu_custom_call.1} parent=5 // pred_fallthru
        _
    $region6: #{tpu_custom_call.1} parent=1 // loop_footer
      %s16 = sadd.s32 1, %s12
    $region7: #{tpu_custom_call.1} parent=1 // loop_footer_branch
      %11 = sbr.rel target = $region3
    $region8: #{tpu_custom_call.1} parent=1 // loop_exit
      _
    %2125 = vsyncpa [#allocation4], 1
    %s2126 = scalar_lea.sflag [#allocation4], 1
    %2127 = vsyncpa %s2126, 1

</llo_original>
